<compile_context>
chip_gen: v5e
topology: v5e:2x2
jax: 0.10.0
libtpu: 0.0.40
codegen_flags: <defaults>
</compile_context>

<pallas_src>
import jax
import jax.numpy as jnp
from jax.experimental import pallas as pl
from jax.experimental.pallas import tpu as pltpu

_BN_EPS = 1e-5
_OUT_PAD = 128      # lane-dense padded logit width (true logits are [:, :2])
_CLINIC_PAD = 8     # clinic contraction dim padded 6 -> 8


def _round_up(x, m):
    return ((x + m - 1) // m) * m


def _tensorcores_per_chip():
    """Best-effort TensorCore count (2 on v7x, 1 on v5e/v6e). Safe fallback = 1."""
    try:
        dev = jax.devices()[0]
        n = getattr(dev, "num_cores", None)
        if isinstance(n, int) and n >= 1:
            return n
        kind = str(getattr(dev, "device_kind", "")).lower()
        if "v7" in kind:
            return 2
    except Exception:
        pass
    return 1


# ---------------------------------------------------------------------------
# Kernel: pure matmul + bias + ReLU chain (all BN affines pre-folded on host)
# ---------------------------------------------------------------------------
def _small_model_kernel(
    x_ref, c_ref,
    w1_ref, b1_ref,
    wr_ref, br_ref,
    wc_ref, bc_ref,
    wo1a_ref, wo1b_ref, bo1_ref,
    wo2_ref, bo2_ref,
    out_ref, rec_ref,
):
    bf16 = jnp.bfloat16
    f32 = jnp.float32

    # astype is a no-op if the caller already supplies bf16 activations.
    x = x_ref[...].astype(bf16)
    c = c_ref[...].astype(bf16)

    # ---- fc branch: h = relu(x @ W1' + b1')    (BN(inf) folded into W1'/b1') ----
    h = jnp.dot(x, w1_ref[...], preferred_element_type=f32) + b1_ref[...]
    h = jnp.maximum(h, 0.0)
    h16 = h.astype(bf16)

    # ---- recon branch: rec = relu(h @ Wr' + br')  (BN(hl)∘BN(hl) folded;
    #      Wr'/br' zero-padded to a multiple of 128 columns -> lane-dense store) ----
    r = jnp.dot(h16, wr_ref[...], preferred_element_type=f32) + br_ref[...]
    rec_ref[...] = jnp.maximum(r, 0.0).astype(rec_ref.dtype)

    # ---- clinic branch: g = relu(c @ Wc' + bc')   (BN(6) folded, K padded to 8) ----
    g = jnp.dot(c, wc_ref[...], preferred_element_type=f32) + bc_ref[...]
    g = jnp.maximum(g, 0.0)
    g16 = g.astype(bf16)

    # ---- output branch: concat([f1, f2]) @ Wo1 as split-weight matmuls
    #      (BN(hl)/BN(256) folded into Wo1a'/Wo1b', shifts into bo1'; on v7x the
    #      two dots accumulate in the MRB, the extra f32 add rides spare VALU) ----
    o = (jnp.dot(h16, wo1a_ref[...], preferred_element_type=f32)
         + jnp.dot(g16, wo1b_ref[...], preferred_element_type=f32)
         + bo1_ref[...])
    o = jnp.maximum(o, 0.0)                       # Dropout(0.5) is identity in eval

    # final Linear(512, 2) with BN(512) folded in; weight zero-padded to 128 lanes
    out_ref[...] = (jnp.dot(o.astype(bf16), wo2_ref[...],
                            preferred_element_type=f32)
                    + bo2_ref[...]).astype(out_ref.dtype)


# ---------------------------------------------------------------------------
# Wrapper: batch-tiled grid, resident weights, lane-dense bf16 padded outputs
# ---------------------------------------------------------------------------
def small_model_forward(x, clinic, fp, *, block_b=None, out_dtype=jnp.bfloat16):
    """Run the SmallModel forward in one Pallas kernel call.

    `fp` is the folded parameter dict from fold_params().
    Returns (logits (B, 2), reconstruction (B, inf_dim)) in `out_dtype`.
    """
    B, inf_dim = x.shape
    hl = fp["w1"].shape[1]
    rec_pad = fp["wr"].shape[1]          # inf_dim rounded up to a multiple of 128

    if block_b is None:
        block_b = min(1024, _round_up(B, 16))
        ntc = _tensorcores_per_chip()
        if ntc >= 2 and _round_up(B, 16) >= 2 * 16:
            # Keep >= 2 grid steps on multi-TC chips so the "parallel" axis
            # actually shards across TensorCores.
            block_b = min(block_b, _round_up(pl.cdiv(B, ntc), 16))
    # Multiple of 16 (bf16 sublane packing); cap keeps f32 intermediates + double
    # buffers well inside the 32 MiB scoped VMEM even on v7x.
    block_b = min(2048, max(16, _round_up(block_b, 16)))

    b_pad = _round_up(B, block_b)
    grid = (b_pad // block_b,)

    if b_pad != B:
        x = jnp.pad(x, ((0, b_pad - B), (0, 0)))
        clinic = jnp.pad(clinic, ((0, b_pad - B), (0, 0)))
    clinic = jnp.pad(clinic, ((0, 0), (0, _CLINIC_PAD - clinic.shape[1])))

    weights = (
        fp["w1"], fp["b1"],
        fp["wr"], fp["br"],
        fp["wc"], fp["bc"],
        fp["wo1a"], fp["wo1b"], fp["bo1"],
        fp["wo2"], fp["bo2"],
    )
    operands = (x, clinic) + weights

    # Activations tiled over batch; weights resident in VMEM across batch tiles.
    def _tiled(last):
        return pl.BlockSpec((block_b, last), lambda i: (i, 0))

    def _resident(arr):
        return pl.BlockSpec(arr.shape, lambda i: (0, 0))

    in_specs = [_tiled(inf_dim), _tiled(_CLINIC_PAD)] + [_resident(w) for w in weights]
    out_specs = (_tiled(_OUT_PAD), _tiled(rec_pad))
    out_shape = (
        jax.ShapeDtypeStruct((b_pad, _OUT_PAD), out_dtype),   # padded logits
        jax.ShapeDtypeStruct((b_pad, rec_pad), out_dtype),    # padded reconstruction
    )

    flops = 2 * b_pad * (inf_dim * hl            # fc
                         + hl * rec_pad          # recon (lane-padded)
                         + _CLINIC_PAD * 256     # clinic
                         + (hl + 256) * 512      # output linear 1 (split weights)
                         + 512 * _OUT_PAD)       # output linear 2 (lane-padded)
    out_bytes = jnp.dtype(out_dtype).itemsize * b_pad * (_OUT_PAD + rec_pad)
    cost = pl.CostEstimate(
        flops=flops,
        transcendentals=0,
        bytes_accessed=sum(int(op.nbytes) for op in operands) + int(out_bytes),
    )

    fn = pl.pallas_call(
        _small_model_kernel,
        out_shape=out_shape,
        grid_spec=pltpu.PrefetchScalarGridSpec(
            num_scalar_prefetch=0,
            grid=grid,
            in_specs=in_specs,
            out_specs=out_specs,
        ),
        compiler_params=pltpu.CompilerParams(
            dimension_semantics=("parallel",),
            vmem_limit_bytes=32 * 1024 * 1024,
        ),
        cost_estimate=cost,
    )
    out_p, rec_p = fn(*operands)
    return out_p[:B, :2], rec_p[:B, :inf_dim]


# ---------------------------------------------------------------------------
# Host-side BN folding: produce the pure matmul-chain parameters
# ---------------------------------------------------------------------------
def fold_params(p, *, mm_dtype=jnp.bfloat16):
    f = {}
    # fc: bn0 -> (w1, b1)
    f["w1"] = (p["bn0_s"].T * p["w1"]).astype(mm_dtype)
    f["b1"] = (p["bn0_b"] @ p["w1"] + p["b1"]).astype(jnp.float32)

    # recon: the recon input is (h*bn1_s + bn1_b)*bnr_s + bnr_b, h = post-ReLU fc.
    # Zero-pad the output dim to a multiple of 128 for a lane-dense store.
    s = p["bn1_s"] * p["bnr_s"]
    t = p["bn1_b"] * p["bnr_s"] + p["bnr_b"]
    wr = s.T * p["wr"]
    br = t @ p["wr"] + p["br"]
    inf_dim = wr.shape[1]
    rec_pad = _round_up(inf_dim, 128)
    f["wr"] = jnp.pad(wr, ((0, 0), (0, rec_pad - inf_dim))).astype(mm_dtype)
    f["br"] = jnp.pad(br, ((0, 0), (0, rec_pad - inf_dim))).astype(jnp.float32)

    # clinic: bnc0 -> (wc, bc); pad contraction dim 6 -> 8 with zero rows
    wc = p["bnc0_s"].T * p["wc"]
    f["wc"] = jnp.pad(wc, ((0, _CLINIC_PAD - wc.shape[0]), (0, 0))).astype(mm_dtype)
    f["bc"] = (p["bnc0_b"] @ p["wc"] + p["bc"]).astype(jnp.float32)

    # output linear 1: bn1 -> wo1a, bnc1 -> wo1b, both shifts folded into bo1
    f["wo1a"] = (p["bn1_s"].T * p["wo1a"]).astype(mm_dtype)
    f["wo1b"] = (p["bnc1_s"].T * p["wo1b"]).astype(mm_dtype)
    f["bo1"] = (p["bo1"] + p["bn1_b"] @ p["wo1a"]
                + p["bnc1_b"] @ p["wo1b"]).astype(jnp.float32)

    # output linear 2: bno -> (wo2, bo2); zero-pad N from 2 -> 128 (lane-dense store)
    wo2 = p["bno_s"].T * p["wo2"]
    bo2 = p["bno_b"] @ p["wo2"] + p["bo2"]
    f["wo2"] = jnp.pad(wo2, ((0, 0), (0, _OUT_PAD - wo2.shape[1]))).astype(mm_dtype)
    f["bo2"] = jnp.pad(bo2, ((0, 0), (0, _OUT_PAD - bo2.shape[1]))).astype(jnp.float32)
    return f


# ---------------------------------------------------------------------------
# Deterministic parameter construction (synthetic; shapes from SmallModel.__init__)
# ---------------------------------------------------------------------------
def _bn_fold(key, feat):
    kg, kb, km, kv = jax.random.split(key, 4)
    gamma = jax.random.uniform(kg, (1, feat), jnp.float32, 0.5, 1.5)
    beta = 0.1 * jax.random.normal(kb, (1, feat), jnp.float32)
    rmean = 0.1 * jax.random.normal(km, (1, feat), jnp.float32)
    rvar = jax.random.uniform(kv, (1, feat), jnp.float32, 0.5, 1.5)
    scale = gamma * jax.lax.rsqrt(rvar + _BN_EPS)
    shift = beta - rmean * scale
    return scale, shift


def _linear(key, fin, fout):
    kw, kb = jax.random.split(key)
    bound = 1.0 / jnp.sqrt(fin)
    w = jax.random.uniform(kw, (fin, fout), jnp.float32, -bound, bound)
    b = jax.random.uniform(kb, (1, fout), jnp.float32, -bound, bound)
    return w, b


def make_params(key, hl, inf_dim):
    keys = jax.random.split(key, 10)
    p = {}
    p["bn0_s"], p["bn0_b"] = _bn_fold(keys[0], inf_dim)
    p["w1"], p["b1"] = _linear(keys[1], inf_dim, hl)
    p["bn1_s"], p["bn1_b"] = _bn_fold(keys[2], hl)

    p["bnc0_s"], p["bnc0_b"] = _bn_fold(keys[3], 6)
    p["wc"], p["bc"] = _linear(keys[4], 6, 256)
    p["bnc1_s"], p["bnc1_b"] = _bn_fold(keys[5], 256)

    p["bnr_s"], p["bnr_b"] = _bn_fold(keys[6], hl)
    p["wr"], p["br"] = _linear(keys[7], hl, inf_dim)

    # output Linear(256 + hl, 512): split the weight into f1-part and f2-part.
    wo1, p["bo1"] = _linear(keys[8], hl + 256, 512)
    p["wo1a"] = wo1[:hl, :]
    p["wo1b"] = wo1[hl:, :]
    p["bno_s"], p["bno_b"] = _bn_fold(keys[9], 512)
    p["wo2"], p["bo2"] = _linear(jax.random.fold_in(key, 123), 512, 2)
    return p


def reference_forward(x, c, p):
    """Pure-JAX f32 reference mirroring the PyTorch forward (eval mode)."""
    h = x * p["bn0_s"] + p["bn0_b"]
    h = jnp.maximum(h @ p["w1"] + p["b1"], 0.0)
    f1 = h * p["bn1_s"] + p["bn1_b"]

    r = f1 * p["bnr_s"] + p["bnr_b"]
    rec = jnp.maximum(r @ p["wr"] + p["br"], 0.0)

    g = c * p["bnc0_s"] + p["bnc0_b"]
    g = jnp.maximum(g @ p["wc"] + p["bc"], 0.0)
    f2 = g * p["bnc1_s"] + p["bnc1_b"]

    cat = jnp.concatenate([f1, f2], axis=-1)
    wo1 = jnp.concatenate([p["wo1a"], p["wo1b"]], axis=0)
    o = jnp.maximum(cat @ wo1 + p["bo1"], 0.0)
    o = o * p["bno_s"] + p["bno_b"]
    out = o @ p["wo2"] + p["bo2"]
    return out, rec


if __name__ == "__main__":
    B, HL, INF = 32, 32, 64

    key = jax.random.PRNGKey(0)
    kx, kc, kp = jax.random.split(key, 3)
    x = jax.random.normal(kx, (B, INF), jnp.float32)
    clinic = jax.random.normal(kc, (B, 6), jnp.float32)
    params = make_params(kp, HL, INF)
    folded = fold_params(params)

    # block_b=16 gives a 2-step batch grid at B=32 (exercises the pipelined grid
    # while respecting the 16-row bf16 sublane-packing minimum).
    out, rec = small_model_forward(x, clinic, folded, block_b=16)
    out = jax.block_until_ready(out)
    rec = jax.block_until_ready(rec)

    ref_out, ref_rec = reference_forward(x, clinic, params)
    assert out.shape == (B, 2) and rec.shape == (B, INF)
    # bf16 MXU matmuls + bf16 output stores -> loosened tolerance vs f32 reference.
    out_f32 = out.astype(jnp.float32)
    rec_f32 = rec.astype(jnp.float32)
    assert jnp.allclose(out_f32, ref_out, atol=5e-2, rtol=5e-2), \
        float(jnp.max(jnp.abs(out_f32 - ref_out)))
    assert jnp.allclose(rec_f32, ref_rec, atol=5e-2, rtol=5e-2), \
        float(jnp.max(jnp.abs(rec_f32 - ref_rec)))

    print("KERNEL_OK")
</pallas_src>

<mosaic_0001>
module attributes {stable_mosaic.version = 11 : i64} {
  func.func @_small_model_kernel(%arg0: i32, %arg1: memref<16x64xf32, #tpu.memory_space<vmem>>, %arg2: memref<16x8xf32, #tpu.memory_space<vmem>>, %arg3: memref<64x32xbf16, #tpu.memory_space<vmem>>, %arg4: memref<1x32xf32, #tpu.memory_space<vmem>>, %arg5: memref<32x128xbf16, #tpu.memory_space<vmem>>, %arg6: memref<1x128xf32, #tpu.memory_space<vmem>>, %arg7: memref<8x256xbf16, #tpu.memory_space<vmem>>, %arg8: memref<1x256xf32, #tpu.memory_space<vmem>>, %arg9: memref<32x512xbf16, #tpu.memory_space<vmem>>, %arg10: memref<256x512xbf16, #tpu.memory_space<vmem>>, %arg11: memref<1x512xf32, #tpu.memory_space<vmem>>, %arg12: memref<512x128xbf16, #tpu.memory_space<vmem>>, %arg13: memref<1x128xf32, #tpu.memory_space<vmem>>, %arg14: memref<16x128xbf16, #tpu.memory_space<vmem>>, %arg15: memref<16x128xbf16, #tpu.memory_space<vmem>>) attributes {dimension_semantics = [#tpu.dimension_semantics<parallel>], iteration_bounds = array<i64: 2>, scalar_prefetch = 0 : i64, scratch_operands = 0 : i64, tpu.core_type = #tpu.core_type<tc>, window_params = [{transform_indices = @transform_0, window_bounds = array<i64: 16, 64>}, {transform_indices = @transform_1, window_bounds = array<i64: 16, 8>}, {pipeline_mode = #tpu.pipeline_mode<synchronous>, transform_indices = @transform_2, window_bounds = array<i64: 64, 32>}, {pipeline_mode = #tpu.pipeline_mode<synchronous>, transform_indices = @transform_3, window_bounds = array<i64: 1, 32>}, {pipeline_mode = #tpu.pipeline_mode<synchronous>, transform_indices = @transform_4, window_bounds = array<i64: 32, 128>}, {pipeline_mode = #tpu.pipeline_mode<synchronous>, transform_indices = @transform_5, window_bounds = array<i64: 1, 128>}, {pipeline_mode = #tpu.pipeline_mode<synchronous>, transform_indices = @transform_6, window_bounds = array<i64: 8, 256>}, {pipeline_mode = #tpu.pipeline_mode<synchronous>, transform_indices = @transform_7, window_bounds = array<i64: 1, 256>}, {pipeline_mode = #tpu.pipeline_mode<synchronous>, transform_indices = @transform_8, window_bounds = array<i64: 32, 512>}, {pipeline_mode = #tpu.pipeline_mode<synchronous>, transform_indices = @transform_9, window_bounds = array<i64: 256, 512>}, {pipeline_mode = #tpu.pipeline_mode<synchronous>, transform_indices = @transform_10, window_bounds = array<i64: 1, 512>}, {pipeline_mode = #tpu.pipeline_mode<synchronous>, transform_indices = @transform_11, window_bounds = array<i64: 512, 128>}, {pipeline_mode = #tpu.pipeline_mode<synchronous>, transform_indices = @transform_12, window_bounds = array<i64: 1, 128>}, {transform_indices = @transform_13, window_bounds = array<i64: 16, 128>}, {transform_indices = @transform_14, window_bounds = array<i64: 16, 128>}]} {
    %c0 = arith.constant 0 : index
    %c0_0 = arith.constant 0 : index
    %0 = vector.load %arg1[%c0, %c0_0] : memref<16x64xf32, #tpu.memory_space<vmem>>, vector<16x64xf32>
    %1 = arith.truncf %0 : vector<16x64xf32> to vector<16x64xbf16>
    %c0_1 = arith.constant 0 : index
    %c0_2 = arith.constant 0 : index
    %2 = vector.load %arg2[%c0_1, %c0_2] : memref<16x8xf32, #tpu.memory_space<vmem>>, vector<16x8xf32>
    %3 = arith.truncf %2 : vector<16x8xf32> to vector<16x8xbf16>
    %c0_3 = arith.constant 0 : index
    %c0_4 = arith.constant 0 : index
    %4 = vector.load %arg3[%c0_3, %c0_4] : memref<64x32xbf16, #tpu.memory_space<vmem>>, vector<64x32xbf16>
    %cst = arith.constant dense<0.000000e+00> : vector<16x32xf32>
    %5 = tpu.matmul %1, %4, %cst {dimension_numbers = #tpu.dot_dimension_numbers<[1], [0], [0], [1], [0, 0, 1, 1], [], []>} : vector<16x64xbf16>, vector<64x32xbf16>, vector<16x32xf32> -> vector<16x32xf32>
    %c0_5 = arith.constant 0 : index
    %c0_6 = arith.constant 0 : index
    %6 = vector.load %arg4[%c0_5, %c0_6] : memref<1x32xf32, #tpu.memory_space<vmem>>, vector<1x32xf32>
    %7 = vector.broadcast %6 : vector<1x32xf32> to vector<16x32xf32>
    %8 = arith.addf %5, %7 : vector<16x32xf32>
    %cst_7 = arith.constant 0.000000e+00 : f32
    %9 = vector.broadcast %cst_7 : f32 to vector<16x32xf32>
    %10 = arith.maximumf %8, %9 : vector<16x32xf32>
    %11 = arith.truncf %10 : vector<16x32xf32> to vector<16x32xbf16>
    %c0_8 = arith.constant 0 : index
    %c0_9 = arith.constant 0 : index
    %12 = vector.load %arg5[%c0_8, %c0_9] : memref<32x128xbf16, #tpu.memory_space<vmem>>, vector<32x128xbf16>
    %cst_10 = arith.constant dense<0.000000e+00> : vector<16x128xf32>
    %13 = tpu.matmul %11, %12, %cst_10 {dimension_numbers = #tpu.dot_dimension_numbers<[1], [0], [0], [1], [0, 0, 1, 1], [], []>} : vector<16x32xbf16>, vector<32x128xbf16>, vector<16x128xf32> -> vector<16x128xf32>
    %c0_11 = arith.constant 0 : index
    %c0_12 = arith.constant 0 : index
    %14 = vector.load %arg6[%c0_11, %c0_12] : memref<1x128xf32, #tpu.memory_space<vmem>>, vector<1x128xf32>
    %15 = vector.broadcast %14 : vector<1x128xf32> to vector<16x128xf32>
    %16 = arith.addf %13, %15 : vector<16x128xf32>
    %cst_13 = arith.constant 0.000000e+00 : f32
    %17 = vector.broadcast %cst_13 : f32 to vector<16x128xf32>
    %18 = arith.maximumf %16, %17 : vector<16x128xf32>
    %19 = arith.truncf %18 : vector<16x128xf32> to vector<16x128xbf16>
    %c0_14 = arith.constant 0 : index
    %c0_15 = arith.constant 0 : index
    %20 = vector.load %arg15[%c0_14, %c0_15] : memref<16x128xbf16, #tpu.memory_space<vmem>>, vector<16x128xbf16>
    tpu.vector_store %arg15[%c0_14, %c0_15], %19 {strides = array<i32>} : memref<16x128xbf16, #tpu.memory_space<vmem>>, vector<16x128xbf16>,
    %c0_16 = arith.constant 0 : index
    %c0_17 = arith.constant 0 : index
    %21 = vector.load %arg7[%c0_16, %c0_17] : memref<8x256xbf16, #tpu.memory_space<vmem>>, vector<8x256xbf16>
    %cst_18 = arith.constant dense<0.000000e+00> : vector<16x256xf32>
    %22 = tpu.matmul %3, %21, %cst_18 {dimension_numbers = #tpu.dot_dimension_numbers<[1], [0], [0], [1], [0, 0, 1, 1], [], []>} : vector<16x8xbf16>, vector<8x256xbf16>, vector<16x256xf32> -> vector<16x256xf32>
    %c0_19 = arith.constant 0 : index
    %c0_20 = arith.constant 0 : index
    %23 = vector.load %arg8[%c0_19, %c0_20] : memref<1x256xf32, #tpu.memory_space<vmem>>, vector<1x256xf32>
    %24 = vector.broadcast %23 : vector<1x256xf32> to vector<16x256xf32>
    %25 = arith.addf %22, %24 : vector<16x256xf32>
    %cst_21 = arith.constant 0.000000e+00 : f32
    %26 = vector.broadcast %cst_21 : f32 to vector<16x256xf32>
    %27 = arith.maximumf %25, %26 : vector<16x256xf32>
    %28 = arith.truncf %27 : vector<16x256xf32> to vector<16x256xbf16>
    %c0_22 = arith.constant 0 : index
    %c0_23 = arith.constant 0 : index
    %29 = vector.load %arg9[%c0_22, %c0_23] : memref<32x512xbf16, #tpu.memory_space<vmem>>, vector<32x512xbf16>
    %cst_24 = arith.constant dense<0.000000e+00> : vector<16x512xf32>
    %30 = tpu.matmul %11, %29, %cst_24 {dimension_numbers = #tpu.dot_dimension_numbers<[1], [0], [0], [1], [0, 0, 1, 1], [], []>} : vector<16x32xbf16>, vector<32x512xbf16>, vector<16x512xf32> -> vector<16x512xf32>
    %c0_25 = arith.constant 0 : index
    %c0_26 = arith.constant 0 : index
    %31 = vector.load %arg10[%c0_25, %c0_26] : memref<256x512xbf16, #tpu.memory_space<vmem>>, vector<256x512xbf16>
    %cst_27 = arith.constant dense<0.000000e+00> : vector<16x512xf32>
    %32 = tpu.matmul %28, %31, %cst_27 {dimension_numbers = #tpu.dot_dimension_numbers<[1], [0], [0], [1], [0, 0, 1, 1], [], []>} : vector<16x256xbf16>, vector<256x512xbf16>, vector<16x512xf32> -> vector<16x512xf32>
    %33 = arith.addf %30, %32 : vector<16x512xf32>
    %c0_28 = arith.constant 0 : index
    %c0_29 = arith.constant 0 : index
    %34 = vector.load %arg11[%c0_28, %c0_29] : memref<1x512xf32, #tpu.memory_space<vmem>>, vector<1x512xf32>
    %35 = vector.broadcast %34 : vector<1x512xf32> to vector<16x512xf32>
    %36 = arith.addf %33, %35 : vector<16x512xf32>
    %cst_30 = arith.constant 0.000000e+00 : f32
    %37 = vector.broadcast %cst_30 : f32 to vector<16x512xf32>
    %38 = arith.maximumf %36, %37 : vector<16x512xf32>
    %39 = arith.truncf %38 : vector<16x512xf32> to vector<16x512xbf16>
    %c0_31 = arith.constant 0 : index
    %c0_32 = arith.constant 0 : index
    %40 = vector.load %arg12[%c0_31, %c0_32] : memref<512x128xbf16, #tpu.memory_space<vmem>>, vector<512x128xbf16>
    %cst_33 = arith.constant dense<0.000000e+00> : vector<16x128xf32>
    %41 = tpu.matmul %39, %40, %cst_33 {dimension_numbers = #tpu.dot_dimension_numbers<[1], [0], [0], [1], [0, 0, 1, 1], [], []>} : vector<16x512xbf16>, vector<512x128xbf16>, vector<16x128xf32> -> vector<16x128xf32>
    %c0_34 = arith.constant 0 : index
    %c0_35 = arith.constant 0 : index
    %42 = vector.load %arg13[%c0_34, %c0_35] : memref<1x128xf32, #tpu.memory_space<vmem>>, vector<1x128xf32>
    %43 = vector.broadcast %42 : vector<1x128xf32> to vector<16x128xf32>
    %44 = arith.addf %41, %43 : vector<16x128xf32>
    %45 = arith.truncf %44 : vector<16x128xf32> to vector<16x128xbf16>
    %c0_36 = arith.constant 0 : index
    %c0_37 = arith.constant 0 : index
    %46 = vector.load %arg14[%c0_36, %c0_37] : memref<16x128xbf16, #tpu.memory_space<vmem>>, vector<16x128xbf16>
    tpu.vector_store %arg14[%c0_36, %c0_37], %45 {strides = array<i32>} : memref<16x128xbf16, #tpu.memory_space<vmem>>, vector<16x128xbf16>,
    return
  }
  func.func @transform_0(%arg0: i32) -> (i32, i32) {
    %c0_i32 = arith.constant 0 : i32
    %c0_i32_0 = arith.constant 0 : i32
    return %arg0, %c0_i32 : i32, i32
  }
  func.func @transform_1(%arg0: i32) -> (i32, i32) {
    %c0_i32 = arith.constant 0 : i32
    %c0_i32_0 = arith.constant 0 : i32
    return %arg0, %c0_i32 : i32, i32
  }
  func.func @transform_2(%arg0: i32) -> (i32, i32) {
    %c0_i32 = arith.constant 0 : i32
    %c0_i32_0 = arith.constant 0 : i32
    %c0_i32_1 = arith.constant 0 : i32
    return %c0_i32, %c0_i32_0 : i32, i32
  }
  func.func @transform_3(%arg0: i32) -> (i32, i32) {
    %c0_i32 = arith.constant 0 : i32
    %c0_i32_0 = arith.constant 0 : i32
    %c0_i32_1 = arith.constant 0 : i32
    return %c0_i32, %c0_i32_0 : i32, i32
  }
  func.func @transform_4(%arg0: i32) -> (i32, i32) {
    %c0_i32 = arith.constant 0 : i32
    %c0_i32_0 = arith.constant 0 : i32
    %c0_i32_1 = arith.constant 0 : i32
    return %c0_i32, %c0_i32_0 : i32, i32
  }
  func.func @transform_5(%arg0: i32) -> (i32, i32) {
    %c0_i32 = arith.constant 0 : i32
    %c0_i32_0 = arith.constant 0 : i32
    %c0_i32_1 = arith.constant 0 : i32
    return %c0_i32, %c0_i32_0 : i32, i32
  }
  func.func @transform_6(%arg0: i32) -> (i32, i32) {
    %c0_i32 = arith.constant 0 : i32
    %c0_i32_0 = arith.constant 0 : i32
    %c0_i32_1 = arith.constant 0 : i32
    return %c0_i32, %c0_i32_0 : i32, i32
  }
  func.func @transform_7(%arg0: i32) -> (i32, i32) {
    %c0_i32 = arith.constant 0 : i32
    %c0_i32_0 = arith.constant 0 : i32
    %c0_i32_1 = arith.constant 0 : i32
    return %c0_i32, %c0_i32_0 : i32, i32
  }
  func.func @transform_8(%arg0: i32) -> (i32, i32) {
    %c0_i32 = arith.constant 0 : i32
    %c0_i32_0 = arith.constant 0 : i32
    %c0_i32_1 = arith.constant 0 : i32
    return %c0_i32, %c0_i32_0 : i32, i32
  }
  func.func @transform_9(%arg0: i32) -> (i32, i32) {
    %c0_i32 = arith.constant 0 : i32
    %c0_i32_0 = arith.constant 0 : i32
    %c0_i32_1 = arith.constant 0 : i32
    return %c0_i32, %c0_i32_0 : i32, i32
  }
  func.func @transform_10(%arg0: i32) -> (i32, i32) {
    %c0_i32 = arith.constant 0 : i32
    %c0_i32_0 = arith.constant 0 : i32
    %c0_i32_1 = arith.constant 0 : i32
    return %c0_i32, %c0_i32_0 : i32, i32
  }
  func.func @transform_11(%arg0: i32) -> (i32, i32) {
    %c0_i32 = arith.constant 0 : i32
    %c0_i32_0 = arith.constant 0 : i32
    %c0_i32_1 = arith.constant 0 : i32
    return %c0_i32, %c0_i32_0 : i32, i32
  }
  func.func @transform_12(%arg0: i32) -> (i32, i32) {
    %c0_i32 = arith.constant 0 : i32
    %c0_i32_0 = arith.constant 0 : i32
    %c0_i32_1 = arith.constant 0 : i32
    return %c0_i32, %c0_i32_0 : i32, i32
  }
  func.func @transform_13(%arg0: i32) -> (i32, i32) {
    %c0_i32 = arith.constant 0 : i32
    %c0_i32_0 = arith.constant 0 : i32
    return %arg0, %c0_i32 : i32, i32
  }
  func.func @transform_14(%arg0: i32) -> (i32, i32) {
    %c0_i32 = arith.constant 0 : i32
    %c0_i32_0 = arith.constant 0 : i32
    return %arg0, %c0_i32 : i32, i32
  }
}

</mosaic_0001>

<llo_original>
// kernel: tpu_custom_call.1
$region0: #{tpu_custom_call.1}
  #allocation0 [shape = 'u32[]', space=smem, size = 0x4, offset = 0x4, fixed_abs, tag = 'smem constant byte address 0x4 - core index']
  #allocation1 [shape = 'u32[72,128]{1,0:T(1,128)}', space=vmem, size = 0x9000, scoped, tag = 'internal scratch']
  %s0 = inlined_call_operand.hbm [shape: f32[32,64], index: 0, kind: input, shape index: {}]
  %s1 = inlined_call_operand.vmem [shape: f32[32,8], index: 1, kind: input, shape index: {}]
  %s2 = inlined_call_operand.vmem [shape: bf16[64,32], index: 2, kind: input, shape index: {}]
  %s3 = inlined_call_operand.vmem [shape: f32[1,32], index: 3, kind: input, shape index: {}]
  %s4 = inlined_call_operand.vmem [shape: bf16[32,128], index: 4, kind: input, shape index: {}]
  %s5 = inlined_call_operand.hbm [shape: f32[1,128], index: 5, kind: input, shape index: {}]
  %s6 = inlined_call_operand.vmem [shape: bf16[8,256], index: 6, kind: input, shape index: {}]
  %s7 = inlined_call_operand.vmem [shape: f32[1,256], index: 7, kind: input, shape index: {}]
  %s8 = inlined_call_operand.vmem [shape: bf16[32,512], index: 8, kind: input, shape index: {}]
  %s9 = inlined_call_operand.hbm [shape: bf16[256,512], index: 9, kind: input, shape index: {}]
  %s10 = inlined_call_operand.vmem [shape: f32[1,512], index: 10, kind: input, shape index: {}]
  %s11 = inlined_call_operand.hbm [shape: bf16[512,128], index: 11, kind: input, shape index: {}]
  %s12 = inlined_call_operand.vmem [shape: f32[1,128], index: 12, kind: input, shape index: {}]
  %s13 = inlined_call_operand.hbm [shape: bf16[32,128], index: 13, kind: output, shape index: {0}]
  %s14 = inlined_call_operand.hbm [shape: bf16[32,128], index: 14, kind: output, shape index: {1}]
  %15 = xla_tuple %s13, %s14
  %s16 = sld [smem:[#allocation0]]
  $region109: #{tpu_custom_call.1} parent=0
    _
  %s18 = ssub.s32 1, %s16
  %s19 = scalar_select 0, %s18, %s16
  $region1: #{tpu_custom_call.1} parent=0
    #allocation2 [shape = 'u8[16384]{0}', space=vmem, size = 0x4000, scoped, tag = 'input window, operand 0']
    #allocation3 [shape = 's32[2]{0}', space=sflag, size = 0x8, scoped, tag = 'scoped memory for tpu_custom_call.1']
    #allocation4 [shape = 's32[2]{0}', space=sflag, size = 0x8, scoped, tag = 'scoped memory for tpu_custom_call.1']
    #allocation5 [shape = 'u8[512]{0}', space=vmem, size = 0x400, scoped, tag = 'input window, operand 5, single buffered']
    #allocation6 [shape = 's32[1]{0}', space=sflag, size = 0x4, scoped, tag = 'scoped memory for tpu_custom_call.1']
    #allocation7 [shape = 'u8[262144]{0}', space=vmem, size = 0x40000, scoped, tag = 'input window, operand 9, single buffered']
    #allocation8 [shape = 'u8[131072]{0}', space=vmem, size = 0x20000, scoped, tag = 'input window, operand 11, single buffered']
    #allocation9 [shape = 's32[1]{0}', space=sflag, size = 0x4, scoped, tag = 'scoped memory for tpu_custom_call.1']
    #allocation10 [shape = 'u8[8192]{0}', space=vmem, size = 0x2000, scoped, tag = 'output window, operand 0']
    #allocation11 [shape = 'u8[8192]{0}', space=vmem, size = 0x2000, scoped, tag = 'output window, operand 1']
    #allocation12 [shape = 's32[2]{0}', space=sflag, size = 0x8, scoped, tag = 'scoped memory for tpu_custom_call.1']
    %20 = vsyncpa [#allocation3], 0
    %s21 = scalar_lea.sflag [#allocation3], 1
    %22 = vsyncpa %s21, 0
    %23 = vsyncpa [#allocation6], 0
    %24 = vsyncpa [#allocation9], 0
    %25 = vsyncpa [#allocation4], 0
    %s26 = scalar_lea.sflag [#allocation4], 1
    %27 = vsyncpa %s26, 0
    %28 = vsyncpa [#allocation12], 0
    %s29 = scalar_lea.sflag [#allocation12], 1
    %30 = vsyncpa %s29, 0
    loop: start=0, step=1, limit=4
    $region2: #{tpu_custom_call.1} parent=1 // loop_pre_header
      _
    $region3: #{tpu_custom_call.1} parent=1 // loop_header
      %s32 = sphi 0, %s36
      %p33 = scmp.ge.s32.totalorder %s32, 4
      %s42 = sphi 0, %s44
      %s45 = sphi 0, %s42
      %s46 = sphi 0, %s45
      %s62 = sphi 0, %s46
      %s68 = sphi 0, %s70
      %s71 = sphi 0, %s68
      %s72 = sphi 0, %s71
      %s88 = sphi 0, %s72
      %s92 = sphi 0, %s92
      %s94 = sphi 0, %s92
      %s95 = sphi 0, %s94
      %s109 = sphi 0, %s95
      %s113 = sphi 0, %s113
      %s115 = sphi 0, %s113
      %s116 = sphi 0, %s115
      %s130 = sphi 0, %s116
      %s134 = sphi 0, %s134
      %s136 = sphi 0, %s134
      %s137 = sphi 0, %s136
      %s151 = sphi 0, %s137
      %s155 = sphi 0, %s155
      %s157 = sphi 0, %s155
      %s158 = sphi 0, %s157
      %s172 = sphi 0, %s158
      %s176 = sphi 0, %s176
      %s178 = sphi 0, %s176
      %s179 = sphi 0, %s178
      %s193 = sphi 0, %s179
      %s197 = sphi 0, %s197
      %s199 = sphi 0, %s197
      %s200 = sphi 0, %s199
      %s214 = sphi 0, %s200
      %s218 = sphi 0, %s218
      %s220 = sphi 0, %s218
      %s221 = sphi 0, %s220
      %s235 = sphi 0, %s221
      %s239 = sphi 0, %s239
      %s241 = sphi 0, %s239
      %s242 = sphi 0, %s241
      %s256 = sphi 0, %s242
      %s260 = sphi 0, %s260
      %s262 = sphi 0, %s260
      %s263 = sphi 0, %s262
      %s277 = sphi 0, %s263
      %s281 = sphi 0, %s281
      %s283 = sphi 0, %s281
      %s284 = sphi 0, %s283
      %s298 = sphi 0, %s284
      %s302 = sphi 0, %s302
      %s304 = sphi 0, %s302
      %s305 = sphi 0, %s304
      %s319 = sphi 0, %s305
      %s325 = sphi 0, %s327
      %s328 = sphi 0, %s325
      %s329 = sphi 0, %s328
      %s345 = sphi 0, %s329
      %s351 = sphi 0, %s353
      %s354 = sphi 0, %s351
      %s355 = sphi 0, %s354
      %s371 = sphi 0, %s355
    $region4: #{tpu_custom_call.1} parent=1 // loop_header_branch
      %35 = sbr.rel (%p33) target = $region8
    $region5: #{tpu_custom_call.1} parent=1 // loop_body
      %s37 = ssub.s32 %s32, 1
      %s38 = ssub.s32 %s32, 2
      %s39 = sadd.s32 %s32, 1
      %s40 = ssub.s32 %s32, %s39
      %p41 = scmp.eq.s32.totalorder %s40, 0
      %s43 = sadd.s32 %s42, 1
      %s44 = scalar_select %p41, %s42, %s43
      %p47 = pneg %p41
      %p48 = scmp.eq.s32.totalorder %s32, 1
      %p49 = por %p47, %p48
      %p50 = scmp.ne.s32.totalorder %s42, %s45
      %p51 = scmp.eq.s32.totalorder %s32, 0
      %p52 = por %p50, %p51
      %p53 = scmp.ne.s32.totalorder %s42, %s45
      %p54 = scmp.eq.s32.totalorder %s37, 1
      %p55 = por %p53, %p54
      %p56 = scmp.ne.s32.totalorder %s45, %s46
      %p57 = scmp.eq.s32.totalorder %s37, 0
      %p58 = por %p56, %p57
      %p59 = scmp.ne.s32.totalorder %s45, %s46
      %p60 = scmp.eq.s32.totalorder %s38, 1
      %p61 = por %p59, %p60
      %p63 = scmp.ne.s32.totalorder %s46, %s62
      %p64 = scmp.eq.s32.totalorder %s38, 0
      %p65 = por %p63, %p64
      %s66 = ssub.s32 %s32, %s39
      %p67 = scmp.eq.s32.totalorder %s66, 0
      %s69 = sadd.s32 %s68, 1
      %s70 = scalar_select %p67, %s68, %s69
      %p73 = pneg %p67
      %p74 = scmp.eq.s32.totalorder %s32, 1
      %p75 = por %p73, %p74
      %p76 = scmp.ne.s32.totalorder %s68, %s71
      %p77 = scmp.eq.s32.totalorder %s32, 0
      %p78 = por %p76, %p77
      %p79 = scmp.ne.s32.totalorder %s68, %s71
      %p80 = scmp.eq.s32.totalorder %s37, 1
      %p81 = por %p79, %p80
      %p82 = scmp.ne.s32.totalorder %s71, %s72
      %p83 = scmp.eq.s32.totalorder %s37, 0
      %p84 = por %p82, %p83
      %p85 = scmp.ne.s32.totalorder %s71, %s72
      %p86 = scmp.eq.s32.totalorder %s38, 1
      %p87 = por %p85, %p86
      %p89 = scmp.ne.s32.totalorder %s72, %s88
      %p90 = scmp.eq.s32.totalorder %s38, 0
      %p91 = por %p89, %p90
      %s93 = sadd.s32 %s92, 1
      %p96 = scmp.eq.s32.totalorder %s32, 1
      %p97 = scmp.ne.s32.totalorder %s92, %s94
      %p98 = scmp.eq.s32.totalorder %s32, 0
      %p99 = por %p97, %p98
      %p100 = scmp.ne.s32.totalorder %s92, %s94
      %p101 = scmp.eq.s32.totalorder %s37, 1
      %p102 = por %p100, %p101
      %p103 = scmp.ne.s32.totalorder %s94, %s95
      %p104 = scmp.eq.s32.totalorder %s37, 0
      %p105 = por %p103, %p104
      %p106 = scmp.ne.s32.totalorder %s94, %s95
      %p107 = scmp.eq.s32.totalorder %s38, 1
      %p108 = por %p106, %p107
      %p110 = scmp.ne.s32.totalorder %s95, %s109
      %p111 = scmp.eq.s32.totalorder %s38, 0
      %p112 = por %p110, %p111
      %s114 = sadd.s32 %s113, 1
      %p117 = scmp.eq.s32.totalorder %s32, 1
      %p118 = scmp.ne.s32.totalorder %s113, %s115
      %p119 = scmp.eq.s32.totalorder %s32, 0
      %p120 = por %p118, %p119
      %p121 = scmp.ne.s32.totalorder %s113, %s115
      %p122 = scmp.eq.s32.totalorder %s37, 1
      %p123 = por %p121, %p122
      %p124 = scmp.ne.s32.totalorder %s115, %s116
      %p125 = scmp.eq.s32.totalorder %s37, 0
      %p126 = por %p124, %p125
      %p127 = scmp.ne.s32.totalorder %s115, %s116
      %p128 = scmp.eq.s32.totalorder %s38, 1
      %p129 = por %p127, %p128
      %p131 = scmp.ne.s32.totalorder %s116, %s130
      %p132 = scmp.eq.s32.totalorder %s38, 0
      %p133 = por %p131, %p132
      %s135 = sadd.s32 %s134, 1
      %p138 = scmp.eq.s32.totalorder %s32, 1
      %p139 = scmp.ne.s32.totalorder %s134, %s136
      %p140 = scmp.eq.s32.totalorder %s32, 0
      %p141 = por %p139, %p140
      %p142 = scmp.ne.s32.totalorder %s134, %s136
      %p143 = scmp.eq.s32.totalorder %s37, 1
      %p144 = por %p142, %p143
      %p145 = scmp.ne.s32.totalorder %s136, %s137
      %p146 = scmp.eq.s32.totalorder %s37, 0
      %p147 = por %p145, %p146
      %p148 = scmp.ne.s32.totalorder %s136, %s137
      %p149 = scmp.eq.s32.totalorder %s38, 1
      %p150 = por %p148, %p149
      %p152 = scmp.ne.s32.totalorder %s137, %s151
      %p153 = scmp.eq.s32.totalorder %s38, 0
      %p154 = por %p152, %p153
      %s156 = sadd.s32 %s155, 1
      %p159 = scmp.eq.s32.totalorder %s32, 1
      %p160 = scmp.ne.s32.totalorder %s155, %s157
      %p161 = scmp.eq.s32.totalorder %s32, 0
      %p162 = por %p160, %p161
      %p163 = scmp.ne.s32.totalorder %s155, %s157
      %p164 = scmp.eq.s32.totalorder %s37, 1
      %p165 = por %p163, %p164
      %p166 = scmp.ne.s32.totalorder %s157, %s158
      %p167 = scmp.eq.s32.totalorder %s37, 0
      %p168 = por %p166, %p167
      %p169 = scmp.ne.s32.totalorder %s157, %s158
      %p170 = scmp.eq.s32.totalorder %s38, 1
      %p171 = por %p169, %p170
      %p173 = scmp.ne.s32.totalorder %s158, %s172
      %p174 = scmp.eq.s32.totalorder %s38, 0
      %p175 = por %p173, %p174
      %s177 = sadd.s32 %s176, 1
      %p180 = scmp.eq.s32.totalorder %s32, 1
      %p181 = scmp.ne.s32.totalorder %s176, %s178
      %p182 = scmp.eq.s32.totalorder %s32, 0
      %p183 = por %p181, %p182
      %p184 = scmp.ne.s32.totalorder %s176, %s178
      %p185 = scmp.eq.s32.totalorder %s37, 1
      %p186 = por %p184, %p185
      %p187 = scmp.ne.s32.totalorder %s178, %s179
      %p188 = scmp.eq.s32.totalorder %s37, 0
      %p189 = por %p187, %p188
      %p190 = scmp.ne.s32.totalorder %s178, %s179
      %p191 = scmp.eq.s32.totalorder %s38, 1
      %p192 = por %p190, %p191
      %p194 = scmp.ne.s32.totalorder %s179, %s193
      %p195 = scmp.eq.s32.totalorder %s38, 0
      %p196 = por %p194, %p195
      %s198 = sadd.s32 %s197, 1
      %p201 = scmp.eq.s32.totalorder %s32, 1
      %p202 = scmp.ne.s32.totalorder %s197, %s199
      %p203 = scmp.eq.s32.totalorder %s32, 0
      %p204 = por %p202, %p203
      %p205 = scmp.ne.s32.totalorder %s197, %s199
      %p206 = scmp.eq.s32.totalorder %s37, 1
      %p207 = por %p205, %p206
      %p208 = scmp.ne.s32.totalorder %s199, %s200
      %p209 = scmp.eq.s32.totalorder %s37, 0
      %p210 = por %p208, %p209
      %p211 = scmp.ne.s32.totalorder %s199, %s200
      %p212 = scmp.eq.s32.totalorder %s38, 1
      %p213 = por %p211, %p212
      %p215 = scmp.ne.s32.totalorder %s200, %s214
      %p216 = scmp.eq.s32.totalorder %s38, 0
      %p217 = por %p215, %p216
      %s219 = sadd.s32 %s218, 1
      %p222 = scmp.eq.s32.totalorder %s32, 1
      %p223 = scmp.ne.s32.totalorder %s218, %s220
      %p224 = scmp.eq.s32.totalorder %s32, 0
      %p225 = por %p223, %p224
      %p226 = scmp.ne.s32.totalorder %s218, %s220
      %p227 = scmp.eq.s32.totalorder %s37, 1
      %p228 = por %p226, %p227
      %p229 = scmp.ne.s32.totalorder %s220, %s221
      %p230 = scmp.eq.s32.totalorder %s37, 0
      %p231 = por %p229, %p230
      %p232 = scmp.ne.s32.totalorder %s220, %s221
      %p233 = scmp.eq.s32.totalorder %s38, 1
      %p234 = por %p232, %p233
      %p236 = scmp.ne.s32.totalorder %s221, %s235
      %p237 = scmp.eq.s32.totalorder %s38, 0
      %p238 = por %p236, %p237
      %s240 = sadd.s32 %s239, 1
      %p243 = scmp.eq.s32.totalorder %s32, 1
      %p244 = scmp.ne.s32.totalorder %s239, %s241
      %p245 = scmp.eq.s32.totalorder %s32, 0
      %p246 = por %p244, %p245
      %p247 = scmp.ne.s32.totalorder %s239, %s241
      %p248 = scmp.eq.s32.totalorder %s37, 1
      %p249 = por %p247, %p248
      %p250 = scmp.ne.s32.totalorder %s241, %s242
      %p251 = scmp.eq.s32.totalorder %s37, 0
      %p252 = por %p250, %p251
      %p253 = scmp.ne.s32.totalorder %s241, %s242
      %p254 = scmp.eq.s32.totalorder %s38, 1
      %p255 = por %p253, %p254
      %p257 = scmp.ne.s32.totalorder %s242, %s256
      %p258 = scmp.eq.s32.totalorder %s38, 0
      %p259 = por %p257, %p258
      %s261 = sadd.s32 %s260, 1
      %p264 = scmp.eq.s32.totalorder %s32, 1
      %p265 = scmp.ne.s32.totalorder %s260, %s262
      %p266 = scmp.eq.s32.totalorder %s32, 0
      %p267 = por %p265, %p266
      %p268 = scmp.ne.s32.totalorder %s260, %s262
      %p269 = scmp.eq.s32.totalorder %s37, 1
      %p270 = por %p268, %p269
      %p271 = scmp.ne.s32.totalorder %s262, %s263
      %p272 = scmp.eq.s32.totalorder %s37, 0
      %p273 = por %p271, %p272
      %p274 = scmp.ne.s32.totalorder %s262, %s263
      %p275 = scmp.eq.s32.totalorder %s38, 1
      %p276 = por %p274, %p275
      %p278 = scmp.ne.s32.totalorder %s263, %s277
      %p279 = scmp.eq.s32.totalorder %s38, 0
      %p280 = por %p278, %p279
      %s282 = sadd.s32 %s281, 1
      %p285 = scmp.eq.s32.totalorder %s32, 1
      %p286 = scmp.ne.s32.totalorder %s281, %s283
      %p287 = scmp.eq.s32.totalorder %s32, 0
      %p288 = por %p286, %p287
      %p289 = scmp.ne.s32.totalorder %s281, %s283
      %p290 = scmp.eq.s32.totalorder %s37, 1
      %p291 = por %p289, %p290
      %p292 = scmp.ne.s32.totalorder %s283, %s284
      %p293 = scmp.eq.s32.totalorder %s37, 0
      %p294 = por %p292, %p293
      %p295 = scmp.ne.s32.totalorder %s283, %s284
      %p296 = scmp.eq.s32.totalorder %s38, 1
      %p297 = por %p295, %p296
      %p299 = scmp.ne.s32.totalorder %s284, %s298
      %p300 = scmp.eq.s32.totalorder %s38, 0
      %p301 = por %p299, %p300
      %s303 = sadd.s32 %s302, 1
      %p306 = scmp.eq.s32.totalorder %s32, 1
      %p307 = scmp.ne.s32.totalorder %s302, %s304
      %p308 = scmp.eq.s32.totalorder %s32, 0
      %p309 = por %p307, %p308
      %p310 = scmp.ne.s32.totalorder %s302, %s304
      %p311 = scmp.eq.s32.totalorder %s37, 1
      %p312 = por %p310, %p311
      %p313 = scmp.ne.s32.totalorder %s304, %s305
      %p314 = scmp.eq.s32.totalorder %s37, 0
      %p315 = por %p313, %p314
      %p316 = scmp.ne.s32.totalorder %s304, %s305
      %p317 = scmp.eq.s32.totalorder %s38, 1
      %p318 = por %p316, %p317
      %p320 = scmp.ne.s32.totalorder %s305, %s319
      %p321 = scmp.eq.s32.totalorder %s38, 0
      %p322 = por %p320, %p321
      %s323 = ssub.s32 %s32, %s39
      %p324 = scmp.eq.s32.totalorder %s323, 0
      %s326 = sadd.s32 %s325, 1
      %s327 = scalar_select %p324, %s325, %s326
      %p330 = pneg %p324
      %p331 = scmp.eq.s32.totalorder %s32, 1
      %p332 = por %p330, %p331
      %p333 = scmp.ne.s32.totalorder %s325, %s328
      %p334 = scmp.eq.s32.totalorder %s32, 0
      %p335 = por %p333, %p334
      %p336 = scmp.ne.s32.totalorder %s325, %s328
      %p337 = scmp.eq.s32.totalorder %s37, 1
      %p338 = por %p336, %p337
      %p339 = scmp.ne.s32.totalorder %s328, %s329
      %p340 = scmp.eq.s32.totalorder %s37, 0
      %p341 = por %p339, %p340
      %p342 = scmp.ne.s32.totalorder %s328, %s329
      %p343 = scmp.eq.s32.totalorder %s38, 1
      %p344 = por %p342, %p343
      %p346 = scmp.ne.s32.totalorder %s329, %s345
      %p347 = scmp.eq.s32.totalorder %s38, 0
      %p348 = por %p346, %p347
      %s349 = ssub.s32 %s32, %s39
      %p350 = scmp.eq.s32.totalorder %s349, 0
      %s352 = sadd.s32 %s351, 1
      %s353 = scalar_select %p350, %s351, %s352
      %p356 = pneg %p350
      %p357 = scmp.eq.s32.totalorder %s32, 1
      %p358 = por %p356, %p357
      %p359 = scmp.ne.s32.totalorder %s351, %s354
      %p360 = scmp.eq.s32.totalorder %s32, 0
      %p361 = por %p359, %p360
      %p362 = scmp.ne.s32.totalorder %s351, %s354
      %p363 = scmp.eq.s32.totalorder %s37, 1
      %p364 = por %p362, %p363
      %p365 = scmp.ne.s32.totalorder %s354, %s355
      %p366 = scmp.eq.s32.totalorder %s37, 0
      %p367 = por %p365, %p366
      %p368 = scmp.ne.s32.totalorder %s354, %s355
      %p369 = scmp.eq.s32.totalorder %s38, 1
      %p370 = por %p368, %p369
      %p372 = scmp.ne.s32.totalorder %s355, %s371
      %p373 = scmp.eq.s32.totalorder %s38, 0
      %p374 = por %p372, %p373
      %p375 = scmp.le.s32.totalorder 1, %s32
      %p376 = scmp.lt.s32.totalorder %s32, 3
      %p377 = pnand %p375, %p376
      %p378 = pneg %p377
      // Predicated region
      $region9: #{tpu_custom_call.1} parent=5 // pred_check
        _
      $region10: #{tpu_custom_call.1} parent=5 // pred_check_branch
        %380 = sbr.rel (%p377) target = $region12
      $region11: #{tpu_custom_call.1} parent=5 // pred_region
        %s381 = ssub.s32 %s32, 1
        // Predicated region
        $region13: #{tpu_custom_call.1} parent=11 // pred_check
          %p382 = pneg %p105
        $region14: #{tpu_custom_call.1} parent=11 // pred_check_branch
          %384 = sbr.rel (%p382) target = $region16
        $region15: #{tpu_custom_call.1} parent=11 // pred_region
          _
        $region16: #{tpu_custom_call.1} parent=11 // pred_fallthru
          _
        // Predicated region
        $region17: #{tpu_custom_call.1} parent=11 // pred_check
          %p385 = pneg %p126
        $region18: #{tpu_custom_call.1} parent=11 // pred_check_branch
          %387 = sbr.rel (%p385) target = $region20
        $region19: #{tpu_custom_call.1} parent=11 // pred_region
          _
        $region20: #{tpu_custom_call.1} parent=11 // pred_fallthru
          _
        // Predicated region
        $region21: #{tpu_custom_call.1} parent=11 // pred_check
          %p388 = pneg %p147
        $region22: #{tpu_custom_call.1} parent=11 // pred_check_branch
          %390 = sbr.rel (%p388) target = $region24
        $region23: #{tpu_custom_call.1} parent=11 // pred_region
          _
        $region24: #{tpu_custom_call.1} parent=11 // pred_fallthru
          _
        // Predicated region
        $region25: #{tpu_custom_call.1} parent=11 // pred_check
          %p391 = pneg %p168
        $region26: #{tpu_custom_call.1} parent=11 // pred_check_branch
          %393 = sbr.rel (%p391) target = $region28
        $region27: #{tpu_custom_call.1} parent=11 // pred_region
          %395 = vsyncadd [#allocation6], 0
          %s397 = sshll.u32 %s5, 4
          %s398 = int_to_ptr.hbm [resolvable:$true] %s397
          %s399 = sshll.u32 [#allocation5], 4
          %s400 = int_to_ptr.vmem [resolvable:$true] %s399
          %402 = dma.hbm_to_vmem [thread:$0]  %s398, 16, %s400, [#allocation6]
        $region28: #{tpu_custom_call.1} parent=11 // pred_fallthru
          _
        // Predicated region
        $region29: #{tpu_custom_call.1} parent=11 // pred_check
          %p403 = pneg %p189
        $region30: #{tpu_custom_call.1} parent=11 // pred_check_branch
          %405 = sbr.rel (%p403) target = $region32
        $region31: #{tpu_custom_call.1} parent=11 // pred_region
          _
        $region32: #{tpu_custom_call.1} parent=11 // pred_fallthru
          _
        // Predicated region
        $region33: #{tpu_custom_call.1} parent=11 // pred_check
          %p406 = pneg %p210
        $region34: #{tpu_custom_call.1} parent=11 // pred_check_branch
          %408 = sbr.rel (%p406) target = $region36
        $region35: #{tpu_custom_call.1} parent=11 // pred_region
          _
        $region36: #{tpu_custom_call.1} parent=11 // pred_fallthru
          _
        // Predicated region
        $region37: #{tpu_custom_call.1} parent=11 // pred_check
          %p409 = pneg %p231
        $region38: #{tpu_custom_call.1} parent=11 // pred_check_branch
          %411 = sbr.rel (%p409) target = $region40
        $region39: #{tpu_custom_call.1} parent=11 // pred_region
          _
        $region40: #{tpu_custom_call.1} parent=11 // pred_fallthru
          _
        // Predicated region
        $region41: #{tpu_custom_call.1} parent=11 // pred_check
          %p412 = pneg %p252
        $region42: #{tpu_custom_call.1} parent=11 // pred_check_branch
          %414 = sbr.rel (%p412) target = $region44
        $region43: #{tpu_custom_call.1} parent=11 // pred_region
          %416 = vsyncadd [#allocation6], 0
          %s417 = sshll.u32 %s9, 4
          %s418 = int_to_ptr.hbm [resolvable:$true] %s417
          %s419 = sshll.u32 [#allocation7], 4
          %s420 = int_to_ptr.vmem [resolvable:$true] %s419
          %425 = dma.hbm_to_vmem [thread:$0]  %s418, 8192, %s420, [#allocation6], 256, 256, 16
        $region44: #{tpu_custom_call.1} parent=11 // pred_fallthru
          _
        // Predicated region
        $region45: #{tpu_custom_call.1} parent=11 // pred_check
          %p426 = pneg %p273
        $region46: #{tpu_custom_call.1} parent=11 // pred_check_branch
          %428 = sbr.rel (%p426) target = $region48
        $region47: #{tpu_custom_call.1} parent=11 // pred_region
          _
        $region48: #{tpu_custom_call.1} parent=11 // pred_fallthru
          _
        // Predicated region
        $region49: #{tpu_custom_call.1} parent=11 // pred_check
          %p429 = pneg %p294
        $region50: #{tpu_custom_call.1} parent=11 // pred_check_branch
          %431 = sbr.rel (%p429) target = $region52
        $region51: #{tpu_custom_call.1} parent=11 // pred_region
          %433 = vsyncadd [#allocation9], 0
          %s434 = sshll.u32 %s11, 4
          %s435 = int_to_ptr.hbm [resolvable:$true] %s434
          %s436 = sshll.u32 [#allocation8], 4
          %s437 = int_to_ptr.vmem [resolvable:$true] %s436
          %442 = dma.hbm_to_vmem [thread:$0]  %s435, 4096, %s437, [#allocation9], 64, 64, 4
        $region52: #{tpu_custom_call.1} parent=11 // pred_fallthru
          _
        // Predicated region
        $region53: #{tpu_custom_call.1} parent=11 // pred_check
          %p443 = pneg %p315
        $region54: #{tpu_custom_call.1} parent=11 // pred_check_branch
          %445 = sbr.rel (%p443) target = $region56
        $region55: #{tpu_custom_call.1} parent=11 // pred_region
          _
        $region56: #{tpu_custom_call.1} parent=11 // pred_fallthru
          _
      $region12: #{tpu_custom_call.1} parent=5 // pred_fallthru
        _
      %p446 = scmp.lt.s32.totalorder %s32, 2
      // Predicated region
      $region57: #{tpu_custom_call.1} parent=5 // pred_check
        %p447 = pneg %p446
      $region58: #{tpu_custom_call.1} parent=5 // pred_check_branch
        %449 = sbr.rel (%p447) target = $region60
      $region59: #{tpu_custom_call.1} parent=5 // pred_region
        // Predicated region
        $region61: #{tpu_custom_call.1} parent=59 // pred_check
          %p450 = pneg %p52
        $region62: #{tpu_custom_call.1} parent=59 // pred_check_branch
          %452 = sbr.rel (%p450) target = $region64
        $region63: #{tpu_custom_call.1} parent=59 // pred_region
          %s453 = sand.u32 %s42, 1
          %s454 = scalar_lea.sflag [#allocation3], %s453
          %s455 = sand.u32 %s42, 1
          %s456 = smul.addr %s455, 16
          %s457 = scalar_lea.vmem [#allocation2], %s456
          %s458 = smul.u32 2, %s32
          %460 = vsyncadd %s454, 0
          %s461 = smul.addr %s458, 8
          %s462 = scalar_lea.hbm %s0, %s461
          %s463 = sshll.u32 %s462, 4
          %s464 = int_to_ptr.hbm [resolvable:$true] %s463
          %s465 = sshll.u32 %s457, 4
          %s466 = int_to_ptr.vmem [resolvable:$true] %s465
          %471 = dma.hbm_to_vmem [thread:$0]  %s464, 256, %s466, %s454, 128, 128, 8
        $region64: #{tpu_custom_call.1} parent=59 // pred_fallthru
          _
        // Predicated region
        $region65: #{tpu_custom_call.1} parent=59 // pred_check
          %p472 = pneg %p78
        $region66: #{tpu_custom_call.1} parent=59 // pred_check_branch
          %474 = sbr.rel (%p472) target = $region68
        $region67: #{tpu_custom_call.1} parent=59 // pred_region
          %s475 = smul.u32 2, %s32
          %p476 = scmp.lt.s32.totalorder %s475, 3
          %s477 = scalar_select %p476, %s475, 3
          %s478 = smul.addr %s477, 8
          %s479 = scalar_lea.vmem %s1, %s478
          %s480 = smul.u32 2, %s32
        $region68: #{tpu_custom_call.1} parent=59 // pred_fallthru
          _
      $region60: #{tpu_custom_call.1} parent=5 // pred_fallthru
        _
      %p481 = scmp.le.s32.totalorder 1, %s32
      %p482 = scmp.lt.s32.totalorder %s32, 3
      %p483 = pnand %p481, %p482
      %p484 = pneg %p483
      // Predicated region
      $region69: #{tpu_custom_call.1} parent=5 // pred_check
        _
      $region70: #{tpu_custom_call.1} parent=5 // pred_check_branch
        %486 = sbr.rel (%p483) target = $region72
      $region71: #{tpu_custom_call.1} parent=5 // pred_region
        %s487 = ssub.s32 %s32, 1
        %s488 = sand.u32 %s45, 1
        %s489 = scalar_lea.sflag [#allocation3], %s488
        %s490 = sand.u32 %s45, 1
        %s491 = smul.addr %s490, 16
        %s492 = scalar_lea.vmem [#allocation2], %s491
        // Predicated region
        $region73: #{tpu_custom_call.1} parent=71 // pred_check
          %p493 = pneg %p58
        $region74: #{tpu_custom_call.1} parent=71 // pred_check_branch
          %495 = sbr.rel (%p493) target = $region76
        $region75: #{tpu_custom_call.1} parent=71 // pred_region
          %497 = dma.done %s489, 256
        $region76: #{tpu_custom_call.1} parent=71 // pred_fallthru
          _
        // Predicated region
        $region77: #{tpu_custom_call.1} parent=71 // pred_check
          %p498 = pneg %p168
        $region78: #{tpu_custom_call.1} parent=71 // pred_check_branch
          %500 = sbr.rel (%p498) target = $region80
        $region79: #{tpu_custom_call.1} parent=71 // pred_region
          %502 = dma.done [#allocation6], 16
        $region80: #{tpu_custom_call.1} parent=71 // pred_fallthru
          _
        // Predicated region
        $region81: #{tpu_custom_call.1} parent=71 // pred_check
          %p503 = pneg %p252
        $region82: #{tpu_custom_call.1} parent=71 // pred_check_branch
          %505 = sbr.rel (%p503) target = $region84
        $region83: #{tpu_custom_call.1} parent=71 // pred_region
          %507 = dma.done [#allocation6], 8192
        $region84: #{tpu_custom_call.1} parent=71 // pred_fallthru
          _
        // Predicated region
        $region85: #{tpu_custom_call.1} parent=71 // pred_check
          %p508 = pneg %p294
        $region86: #{tpu_custom_call.1} parent=71 // pred_check_branch
          %510 = sbr.rel (%p508) target = $region88
        $region87: #{tpu_custom_call.1} parent=71 // pred_region
          %512 = dma.done [#allocation9], 4096
        $region88: #{tpu_custom_call.1} parent=71 // pred_fallthru
          _
        %s513 = sand.u32 %s45, 1
        %s514 = scalar_lea.sflag [#allocation3], %s513
        %s515 = sand.u32 %s45, 1
        %s516 = smul.addr %s515, 16
        %s517 = scalar_lea.vmem [#allocation2], %s516
        %p518 = pneg %p58
        %p519 = pneg %p55
        %s520 = smul.u32 2, %s37
        %p521 = scmp.lt.s32.totalorder %s520, 3
        %s522 = scalar_select %p521, %s520, 3
        %s523 = smul.addr %s522, 8
        %s524 = scalar_lea.vmem %s1, %s523
        %p525 = pneg %p84
        %p526 = pneg %p81
        %p527 = pneg %p105
        %p528 = pneg %p102
        %p529 = pneg %p126
        %p530 = pneg %p123
        %p531 = pneg %p147
        %p532 = pneg %p144
        %p533 = pneg %p168
        %p534 = pneg %p165
        %p535 = pneg %p189
        %p536 = pneg %p186
        %p537 = pneg %p210
        %p538 = pneg %p207
        %p539 = pneg %p231
        %p540 = pneg %p228
        %p541 = pneg %p252
        %p542 = pneg %p249
        %p543 = pneg %p273
        %p544 = pneg %p270
        %p545 = pneg %p294
        %p546 = pneg %p291
        %p547 = pneg %p315
        %p548 = pneg %p312
        %p549 = pneg %p341
        %p550 = pneg %p338
        %s551 = sand.u32 %s328, 1
        %s552 = scalar_lea.sflag [#allocation4], %s551
        %s553 = sand.u32 %s328, 1
        %s554 = smul.addr %s553, 8
        %s555 = scalar_lea.vmem [#allocation10], %s554
        %p556 = pneg %p367
        %p557 = pneg %p364
        %s558 = sand.u32 %s354, 1
        %s559 = scalar_lea.sflag [#allocation12], %s558
        %s560 = sand.u32 %s354, 1
        %s561 = smul.addr %s560, 8
        %s562 = scalar_lea.vmem [#allocation11], %s561
        %s563 = smul.u32 2, %s37
        %s564 = smul.u32 2, %s37
        %p565 = scmp.lt.s32.totalorder %s564, 3
        %s566 = scalar_select %p565, %s564, 3
        %s567 = smul.addr %s566, 8
        %s568 = scalar_lea.vmem %s1, %s567
        %s569 = smul.u32 2, %s37
        %s570 = smul.u32 2, %s37
        %s571 = smul.u32 2, %s37
        %v573 = vld [vmem:[%s492] sm:$0xff]
        %v574 = vld [vmem:[%s492 + $0x8] sm:$0xff]
        %v575 = vpack.c.bf16 %v574, %v573
        %v576 = vld [vmem:[%s568] sm:$0xff]
        %v577 = vld [vmem:[%s568 + $0x8] sm:$0xff]
        %v578 = vpack.c.bf16 %v577, %v576
        %v579 = vld [vmem:[%s2] sm:$0xf]
        %v580 = vld [vmem:[%s2 + $0x4] sm:$0xf]
        %v581 = vld [vmem:[%s2 + $0x8] sm:$0xf]
        %v582 = vld [vmem:[%s2 + $0xc] sm:$0xf]
        %v583 = vld [vmem:[%s2 + $0x10] sm:$0xf]
        %v584 = vld [vmem:[%s2 + $0x14] sm:$0xf]
        %v585 = vld [vmem:[%s2 + $0x18] sm:$0xf]
        %v586 = vld [vmem:[%s2 + $0x1c] sm:$0xf]
        %v587 = vld [vmem:[%s3] sm:$0x1]
        %v589 = vperm.slane %v587, 0
        %v599 = vunpack.c.l.b16 %v579
        %v600 = vunpack.c.l.b16 %v580
        %v601 = vunpack.c.l.b16 %v581
        %v602 = vunpack.c.l.b16 %v582
        %v603 = vunpack.c.l.b16 %v583
        %v604 = vunpack.c.l.b16 %v584
        %v605 = vunpack.c.l.b16 %v585
        %v606 = vunpack.c.l.b16 %v586
        %v607 = vpack.c.b16 %v600, %v599
        %v608 = vpack.c.b16 %v602, %v601
        %v609 = vpack.c.b16 %v604, %v603
        %v610 = vpack.c.b16 %v606, %v605
        %vm615 = vcmask 523264
        %v617 = vsel %vm615, %v575, 0
        %619 = vmatpush.bf16.msra.mxu0 0
        %620 = vmatpush.bf16.msra.mxu0 0
        %621 = vmatpush.bf16.msra.mxu0 0
        %622 = vmatpush.bf16.msra.mxu0 0
        %623 = vmatpush.bf16.msra.mxu0 %v610
        %624 = vmatpush.bf16.msra.mxu0 %v609
        %625 = vmatpush.bf16.msra.mxu0 %v608
        %626 = vmatpush.bf16.msra.mxu0 %v607
        %627 = vmatmul.bf16.gmra.mxu0 %v617
        %v628 = vpop.f32.mrf.mxu0
        %v629 = vadd.f32 %v589, %v628
        %v630 = vpop.f32.mrf.mxu0
        %v631 = vadd.f32 %v589, %v630
        %632 = vdwg.mxu0
        %v633 = vmax.f32 %v629, 0.0
        %v634 = vmax.f32 %v631, 0.0
        %v635 = vpack.c.bf16 %v634, %v633
        %v636 = vld [vmem:[%s4] sm:$0xf]
        %v637 = vld [vmem:[%s4 + $0x4] sm:$0xf]
        %v638 = vld [vmem:[%s4 + $0x8] sm:$0xf]
        %v639 = vld [vmem:[%s4 + $0xc] sm:$0xf]
        %v640 = vld [vmem:[#allocation5] sm:$0x1]
        %v642 = vperm.slane %v640, 0
        %v648 = vunpack.c.l.b16 %v636
        %v649 = vunpack.c.l.b16 %v637
        %v650 = vunpack.c.l.b16 %v638
        %v651 = vunpack.c.l.b16 %v639
        %v652 = vpack.c.b16 %v649, %v648
        %v653 = vpack.c.b16 %v651, %v650
        %vm656 = vcmask 261120
        %v658 = vsel %vm656, %v635, 0
        %660 = vmatpush.bf16.msra.mxu0 0
        %661 = vmatpush.bf16.msra.mxu0 0
        %662 = vmatpush.bf16.msra.mxu0 0
        %663 = vmatpush.bf16.msra.mxu0 0
        %664 = vmatpush.bf16.msra.mxu0 0
        %665 = vmatpush.bf16.msra.mxu0 0
        %666 = vmatpush.bf16.msra.mxu0 %v653
        %667 = vmatpush.bf16.msra.mxu0 %v652
        %668 = vmatmul.bf16.gmra.mxu0 %v658
        %v669 = vpop.f32.mrf.mxu0
        %v670 = vadd.f32 %v642, %v669
        %v671 = vpop.f32.mrf.mxu0
        %v672 = vadd.f32 %v642, %v671
        %673 = vdwg.mxu0
        %v674 = vmax.f32 %v670, 0.0
        %v675 = vmax.f32 %v672, 0.0
        %v676 = vpack.c.bf16 %v674, %v674
        %v677 = vpack.c.bf16 %v675, %v675
        %678 = vst [vmem:[%s562] sm:$0xf] %v676
        %679 = vst [vmem:[%s562 + $0x4] sm:$0xf] %v677
        %v680 = vld [vmem:[%s6] sm:$0xff]
        %v681 = vld [vmem:[%s7] sm:$0x3]
        %v683 = vperm.slane %v681, 0
        %v684 = vperm.slane %v681, 1
        %v688 = vunpack.c.l.b16 %v680
        %v689 = vunpack.c.h.b16 %v680
        %v690 = vpack.c.b16 %v688, %v688
        %v691 = vpack.c.b16 %v689, %v689
        %vm692 = vcmask 64512
        %v694 = vsel %vm692, %v578, 0
        %vm696 = vcmask 1043456
        %v698 = vsel %vm696, %v690, 0
        %v701 = vsel %vm696, %v691, 0
        %703 = vmatpush.bf16.msra.mxu0 0
        %704 = vmatpush.bf16.msra.mxu0 0
        %705 = vmatpush.bf16.msra.mxu0 0
        %706 = vmatpush.bf16.msra.mxu0 0
        %707 = vmatpush.bf16.msra.mxu0 0
        %708 = vmatpush.bf16.msra.mxu0 0
        %709 = vmatpush.bf16.msra.mxu0 0
        %710 = vmatpush.bf16.msra.mxu0 %v698
        %711 = vmatmul.bf16.gmra.mxu0 %v694
        %v712 = vpop.f32.mrf.mxu0
        %v713 = vadd.f32 %v683, %v712
        %v714 = vpop.f32.mrf.mxu0
        %v715 = vadd.f32 %v683, %v714
        %716 = vdwg.mxu0
        %717 = vmatpush.bf16.msra.mxu0 0
        %718 = vmatpush.bf16.msra.mxu0 0
        %719 = vmatpush.bf16.msra.mxu0 0
        %720 = vmatpush.bf16.msra.mxu0 0
        %721 = vmatpush.bf16.msra.mxu0 0
        %722 = vmatpush.bf16.msra.mxu0 0
        %723 = vmatpush.bf16.msra.mxu0 0
        %724 = vmatpush.bf16.msra.mxu0 %v701
        %725 = vmatmul.bf16.gmra.mxu0 %v694
        %v726 = vpop.f32.mrf.mxu0
        %v727 = vadd.f32 %v684, %v726
        %v728 = vpop.f32.mrf.mxu0
        %v729 = vadd.f32 %v684, %v728
        %730 = vdwg.mxu0
        %v731 = vmax.f32 %v713, 0.0
        %v732 = vmax.f32 %v727, 0.0
        %v733 = vmax.f32 %v715, 0.0
        %v734 = vmax.f32 %v729, 0.0
        %v735 = vpack.c.bf16 %v733, %v731
        %v736 = vpack.c.bf16 %v734, %v732
        %v737 = vld [vmem:[%s8] sm:$0xff]
        %v738 = vld [vmem:[%s8 + $0x8] sm:$0xff]
        %v739 = vld [vmem:[%s8 + $0x10] sm:$0xff]
        %v740 = vld [vmem:[%s8 + $0x18] sm:$0xff]
        %v741 = vld [vmem:[%s8 + $0x20] sm:$0xff]
        %v742 = vld [vmem:[%s8 + $0x28] sm:$0xff]
        %v743 = vld [vmem:[%s8 + $0x30] sm:$0xff]
        %v744 = vld [vmem:[%s8 + $0x38] sm:$0xff]
        %v745 = vld [vmem:[#allocation7] sm:$0xff]
        %v746 = vld [vmem:[#allocation7 + $0x8] sm:$0xff]
        %v747 = vld [vmem:[#allocation7 + $0x10] sm:$0xff]
        %v748 = vld [vmem:[#allocation7 + $0x18] sm:$0xff]
        %v749 = vld [vmem:[#allocation7 + $0x20] sm:$0xff]
        %v750 = vld [vmem:[#allocation7 + $0x28] sm:$0xff]
        %v751 = vld [vmem:[#allocation7 + $0x30] sm:$0xff]
        %v752 = vld [vmem:[#allocation7 + $0x38] sm:$0xff]
        %v753 = vld [vmem:[#allocation7 + $0x40] sm:$0xff]
        %v754 = vld [vmem:[#allocation7 + $0x48] sm:$0xff]
        %v755 = vld [vmem:[#allocation7 + $0x50] sm:$0xff]
        %v756 = vld [vmem:[#allocation7 + $0x58] sm:$0xff]
        %v757 = vld [vmem:[#allocation7 + $0x60] sm:$0xff]
        %v758 = vld [vmem:[#allocation7 + $0x68] sm:$0xff]
        %v759 = vld [vmem:[#allocation7 + $0x70] sm:$0xff]
        %v760 = vld [vmem:[#allocation7 + $0x78] sm:$0xff]
        %v761 = vld [vmem:[#allocation7 + $0x80] sm:$0xff]
        %v762 = vld [vmem:[#allocation7 + $0x88] sm:$0xff]
        %v763 = vld [vmem:[#allocation7 + $0x90] sm:$0xff]
        %v764 = vld [vmem:[#allocation7 + $0x98] sm:$0xff]
        %v765 = vld [vmem:[#allocation7 + $0xa0] sm:$0xff]
        %v766 = vld [vmem:[#allocation7 + $0xa8] sm:$0xff]
        %v767 = vld [vmem:[#allocation7 + $0xb0] sm:$0xff]
        %v768 = vld [vmem:[#allocation7 + $0xb8] sm:$0xff]
        %v769 = vld [vmem:[#allocation7 + $0xc0] sm:$0xff]
        %v770 = vld [vmem:[#allocation7 + $0xc8] sm:$0xff]
        %v771 = vld [vmem:[#allocation7 + $0xd0] sm:$0xff]
        %v772 = vld [vmem:[#allocation7 + $0xd8] sm:$0xff]
        %v773 = vld [vmem:[#allocation7 + $0xe0] sm:$0xff]
        %v774 = vld [vmem:[#allocation7 + $0xe8] sm:$0xff]
        %v775 = vld [vmem:[#allocation7 + $0xf0] sm:$0xff]
        %v776 = vld [vmem:[#allocation7 + $0xf8] sm:$0xff]
        %v777 = vld [vmem:[#allocation7 + $0x100] sm:$0xff]
        %v778 = vld [vmem:[#allocation7 + $0x108] sm:$0xff]
        %v779 = vld [vmem:[#allocation7 + $0x110] sm:$0xff]
        %v780 = vld [vmem:[#allocation7 + $0x118] sm:$0xff]
        %v781 = vld [vmem:[#allocation7 + $0x120] sm:$0xff]
        %v782 = vld [vmem:[#allocation7 + $0x128] sm:$0xff]
        %v783 = vld [vmem:[#allocation7 + $0x130] sm:$0xff]
        %v784 = vld [vmem:[#allocation7 + $0x138] sm:$0xff]
        %v785 = vld [vmem:[#allocation7 + $0x140] sm:$0xff]
        %v786 = vld [vmem:[#allocation7 + $0x148] sm:$0xff]
        %v787 = vld [vmem:[#allocation7 + $0x150] sm:$0xff]
        %v788 = vld [vmem:[#allocation7 + $0x158] sm:$0xff]
        %v789 = vld [vmem:[#allocation7 + $0x160] sm:$0xff]
        %v790 = vld [vmem:[#allocation7 + $0x168] sm:$0xff]
        %v791 = vld [vmem:[#allocation7 + $0x170] sm:$0xff]
        %v792 = vld [vmem:[#allocation7 + $0x178] sm:$0xff]
        %v793 = vld [vmem:[#allocation7 + $0x180] sm:$0xff]
        %v794 = vld [vmem:[#allocation7 + $0x188] sm:$0xff]
        %v795 = vld [vmem:[#allocation7 + $0x190] sm:$0xff]
        %v796 = vld [vmem:[#allocation7 + $0x198] sm:$0xff]
        %v797 = vld [vmem:[#allocation7 + $0x1a0] sm:$0xff]
        %v798 = vld [vmem:[#allocation7 + $0x1a8] sm:$0xff]
        %v799 = vld [vmem:[#allocation7 + $0x1b0] sm:$0xff]
        %v800 = vld [vmem:[#allocation7 + $0x1b8] sm:$0xff]
        %v801 = vld [vmem:[#allocation7 + $0x1c0] sm:$0xff]
        %v802 = vld [vmem:[#allocation7 + $0x1c8] sm:$0xff]
        %v803 = vld [vmem:[#allocation7 + $0x1d0] sm:$0xff]
        %v804 = vld [vmem:[#allocation7 + $0x1d8] sm:$0xff]
        %v805 = vld [vmem:[#allocation7 + $0x1e0] sm:$0xff]
        %v806 = vld [vmem:[#allocation7 + $0x1e8] sm:$0xff]
        %v807 = vld [vmem:[#allocation7 + $0x1f0] sm:$0xff]
        %v808 = vld [vmem:[#allocation7 + $0x1f8] sm:$0xff]
        %v873 = vunpack.c.l.b16 %v745
        %v874 = vunpack.c.h.b16 %v745
        %v875 = vunpack.c.l.b16 %v746
        %v876 = vunpack.c.h.b16 %v746
        %v877 = vunpack.c.l.b16 %v747
        %v878 = vunpack.c.h.b16 %v747
        %v879 = vunpack.c.l.b16 %v748
        %v880 = vunpack.c.h.b16 %v748
        %v881 = vunpack.c.l.b16 %v749
        %v882 = vunpack.c.h.b16 %v749
        %v883 = vunpack.c.l.b16 %v750
        %v884 = vunpack.c.h.b16 %v750
        %v885 = vunpack.c.l.b16 %v751
        %v886 = vunpack.c.h.b16 %v751
        %v887 = vunpack.c.l.b16 %v752
        %v888 = vunpack.c.h.b16 %v752
        %v889 = vunpack.c.l.b16 %v753
        %v890 = vunpack.c.h.b16 %v753
        %v891 = vunpack.c.l.b16 %v754
        %v892 = vunpack.c.h.b16 %v754
        %v893 = vunpack.c.l.b16 %v755
        %v894 = vunpack.c.h.b16 %v755
        %v895 = vunpack.c.l.b16 %v756
        %v896 = vunpack.c.h.b16 %v756
        %v897 = vunpack.c.l.b16 %v757
        %v898 = vunpack.c.h.b16 %v757
        %v899 = vunpack.c.l.b16 %v758
        %v900 = vunpack.c.h.b16 %v758
        %v901 = vunpack.c.l.b16 %v759
        %v902 = vunpack.c.h.b16 %v759
        %v903 = vunpack.c.l.b16 %v760
        %v904 = vunpack.c.h.b16 %v760
        %v905 = vunpack.c.l.b16 %v761
        %v906 = vunpack.c.h.b16 %v761
        %v907 = vunpack.c.l.b16 %v762
        %v908 = vunpack.c.h.b16 %v762
        %v909 = vunpack.c.l.b16 %v763
        %v910 = vunpack.c.h.b16 %v763
        %v911 = vunpack.c.l.b16 %v764
        %v912 = vunpack.c.h.b16 %v764
        %v913 = vunpack.c.l.b16 %v765
        %v914 = vunpack.c.h.b16 %v765
        %v915 = vunpack.c.l.b16 %v766
        %v916 = vunpack.c.h.b16 %v766
        %v917 = vunpack.c.l.b16 %v767
        %v918 = vunpack.c.h.b16 %v767
        %v919 = vunpack.c.l.b16 %v768
        %v920 = vunpack.c.h.b16 %v768
        %v921 = vunpack.c.l.b16 %v769
        %v922 = vunpack.c.h.b16 %v769
        %v923 = vunpack.c.l.b16 %v770
        %v924 = vunpack.c.h.b16 %v770
        %v925 = vunpack.c.l.b16 %v771
        %v926 = vunpack.c.h.b16 %v771
        %v927 = vunpack.c.l.b16 %v772
        %v928 = vunpack.c.h.b16 %v772
        %v929 = vunpack.c.l.b16 %v773
        %v930 = vunpack.c.h.b16 %v773
        %v931 = vunpack.c.l.b16 %v774
        %v932 = vunpack.c.h.b16 %v774
        %v933 = vunpack.c.l.b16 %v775
        %v934 = vunpack.c.h.b16 %v775
        %v935 = vunpack.c.l.b16 %v776
        %v936 = vunpack.c.h.b16 %v776
        %v937 = vunpack.c.l.b16 %v777
        %v938 = vunpack.c.h.b16 %v777
        %v939 = vunpack.c.l.b16 %v778
        %v940 = vunpack.c.h.b16 %v778
        %v941 = vunpack.c.l.b16 %v779
        %v942 = vunpack.c.h.b16 %v779
        %v943 = vunpack.c.l.b16 %v780
        %v944 = vunpack.c.h.b16 %v780
        %v945 = vunpack.c.l.b16 %v781
        %v946 = vunpack.c.h.b16 %v781
        %v947 = vunpack.c.l.b16 %v782
        %v948 = vunpack.c.h.b16 %v782
        %v949 = vunpack.c.l.b16 %v783
        %v950 = vunpack.c.h.b16 %v783
        %v951 = vunpack.c.l.b16 %v784
        %v952 = vunpack.c.h.b16 %v784
        %v953 = vunpack.c.l.b16 %v785
        %v954 = vunpack.c.h.b16 %v785
        %v955 = vunpack.c.l.b16 %v786
        %v956 = vunpack.c.h.b16 %v786
        %v957 = vunpack.c.l.b16 %v787
        %v958 = vunpack.c.h.b16 %v787
        %v959 = vunpack.c.l.b16 %v788
        %v960 = vunpack.c.h.b16 %v788
        %v961 = vunpack.c.l.b16 %v789
        %v962 = vunpack.c.h.b16 %v789
        %v963 = vunpack.c.l.b16 %v790
        %v964 = vunpack.c.h.b16 %v790
        %v965 = vunpack.c.l.b16 %v791
        %v966 = vunpack.c.h.b16 %v791
        %v967 = vunpack.c.l.b16 %v792
        %v968 = vunpack.c.h.b16 %v792
        %v969 = vunpack.c.l.b16 %v793
        %v970 = vunpack.c.h.b16 %v793
        %v971 = vunpack.c.l.b16 %v794
        %v972 = vunpack.c.h.b16 %v794
        %v973 = vunpack.c.l.b16 %v795
        %v974 = vunpack.c.h.b16 %v795
        %v975 = vunpack.c.l.b16 %v796
        %v976 = vunpack.c.h.b16 %v796
        %v977 = vunpack.c.l.b16 %v797
        %v978 = vunpack.c.h.b16 %v797
        %v979 = vunpack.c.l.b16 %v798
        %v980 = vunpack.c.h.b16 %v798
        %v981 = vunpack.c.l.b16 %v799
        %v982 = vunpack.c.h.b16 %v799
        %v983 = vunpack.c.l.b16 %v800
        %v984 = vunpack.c.h.b16 %v800
        %v985 = vunpack.c.l.b16 %v801
        %v986 = vunpack.c.h.b16 %v801
        %v987 = vunpack.c.l.b16 %v802
        %v988 = vunpack.c.h.b16 %v802
        %v989 = vunpack.c.l.b16 %v803
        %v990 = vunpack.c.h.b16 %v803
        %v991 = vunpack.c.l.b16 %v804
        %v992 = vunpack.c.h.b16 %v804
        %v993 = vunpack.c.l.b16 %v805
        %v994 = vunpack.c.h.b16 %v805
        %v995 = vunpack.c.l.b16 %v806
        %v996 = vunpack.c.h.b16 %v806
        %v997 = vunpack.c.l.b16 %v807
        %v998 = vunpack.c.h.b16 %v807
        %v999 = vunpack.c.l.b16 %v808
        %v1000 = vunpack.c.h.b16 %v808
        %v1001 = vpack.c.b16 %v877, %v873
        %v1002 = vpack.c.b16 %v878, %v874
        %v1003 = vpack.c.b16 %v879, %v875
        %v1004 = vpack.c.b16 %v880, %v876
        %v1005 = vpack.c.b16 %v885, %v881
        %v1006 = vpack.c.b16 %v886, %v882
        %v1007 = vpack.c.b16 %v887, %v883
        %v1008 = vpack.c.b16 %v888, %v884
        %v1009 = vpack.c.b16 %v893, %v889
        %v1010 = vpack.c.b16 %v894, %v890
        %v1011 = vpack.c.b16 %v895, %v891
        %v1012 = vpack.c.b16 %v896, %v892
        %v1013 = vpack.c.b16 %v901, %v897
        %v1014 = vpack.c.b16 %v902, %v898
        %v1015 = vpack.c.b16 %v903, %v899
        %v1016 = vpack.c.b16 %v904, %v900
        %v1017 = vpack.c.b16 %v909, %v905
        %v1018 = vpack.c.b16 %v910, %v906
        %v1019 = vpack.c.b16 %v911, %v907
        %v1020 = vpack.c.b16 %v912, %v908
        %v1021 = vpack.c.b16 %v917, %v913
        %v1022 = vpack.c.b16 %v918, %v914
        %v1023 = vpack.c.b16 %v919, %v915
        %v1024 = vpack.c.b16 %v920, %v916
        %v1025 = vpack.c.b16 %v925, %v921
        %v1026 = vpack.c.b16 %v926, %v922
        %v1027 = vpack.c.b16 %v927, %v923
        %v1028 = vpack.c.b16 %v928, %v924
        %v1029 = vpack.c.b16 %v933, %v929
        %v1030 = vpack.c.b16 %v934, %v930
        %v1031 = vpack.c.b16 %v935, %v931
        %v1032 = vpack.c.b16 %v936, %v932
        %v1033 = vpack.c.b16 %v941, %v937
        %v1034 = vpack.c.b16 %v942, %v938
        %v1035 = vpack.c.b16 %v943, %v939
        %v1036 = vpack.c.b16 %v944, %v940
        %v1037 = vpack.c.b16 %v949, %v945
        %v1038 = vpack.c.b16 %v950, %v946
        %v1039 = vpack.c.b16 %v951, %v947
        %v1040 = vpack.c.b16 %v952, %v948
        %v1041 = vpack.c.b16 %v957, %v953
        %v1042 = vpack.c.b16 %v958, %v954
        %v1043 = vpack.c.b16 %v959, %v955
        %v1044 = vpack.c.b16 %v960, %v956
        %v1045 = vpack.c.b16 %v965, %v961
        %v1046 = vpack.c.b16 %v966, %v962
        %v1047 = vpack.c.b16 %v967, %v963
        %v1048 = vpack.c.b16 %v968, %v964
        %v1049 = vpack.c.b16 %v973, %v969
        %v1050 = vpack.c.b16 %v974, %v970
        %v1051 = vpack.c.b16 %v975, %v971
        %v1052 = vpack.c.b16 %v976, %v972
        %v1053 = vpack.c.b16 %v981, %v977
        %v1054 = vpack.c.b16 %v982, %v978
        %v1055 = vpack.c.b16 %v983, %v979
        %v1056 = vpack.c.b16 %v984, %v980
        %v1057 = vpack.c.b16 %v989, %v985
        %v1058 = vpack.c.b16 %v990, %v986
        %v1059 = vpack.c.b16 %v991, %v987
        %v1060 = vpack.c.b16 %v992, %v988
        %v1061 = vpack.c.b16 %v997, %v993
        %v1062 = vpack.c.b16 %v998, %v994
        %v1063 = vpack.c.b16 %v999, %v995
        %v1064 = vpack.c.b16 %v1000, %v996
        %1129 = vmatpush.bf16.msra.mxu0 %v1029
        %1130 = vmatpush.bf16.msra.mxu0 %v1025
        %1131 = vmatpush.bf16.msra.mxu0 %v1021
        %1132 = vmatpush.bf16.msra.mxu0 %v1017
        %1133 = vmatpush.bf16.msra.mxu0 %v1013
        %1134 = vmatpush.bf16.msra.mxu0 %v1009
        %1135 = vmatpush.bf16.msra.mxu0 %v1005
        %1136 = vmatpush.bf16.msra.mxu0 %v1001
        %1137 = vmatmul.bf16.gmra.mxu0 %v735
        %v1138 = vpop.f32.mrf.mxu0
        %v1139 = vadd.f32 0.0, %v1138
        %v1140 = vpop.f32.mrf.mxu0
        %v1141 = vadd.f32 0.0, %v1140
        %1142 = vdwg.mxu0
        %1143 = vmatpush.bf16.msra.mxu0 %v1061
        %1144 = vmatpush.bf16.msra.mxu0 %v1057
        %1145 = vmatpush.bf16.msra.mxu0 %v1053
        %1146 = vmatpush.bf16.msra.mxu0 %v1049
        %1147 = vmatpush.bf16.msra.mxu0 %v1045
        %1148 = vmatpush.bf16.msra.mxu0 %v1041
        %1149 = vmatpush.bf16.msra.mxu0 %v1037
        %1150 = vmatpush.bf16.msra.mxu0 %v1033
        %1151 = vmatmul.bf16.gmra.mxu0 %v736
        %v1152 = vpop.f32.mrf.mxu0
        %v1153 = vadd.f32 %v1139, %v1152
        %v1154 = vpop.f32.mrf.mxu0
        %v1155 = vadd.f32 %v1141, %v1154
        %1156 = vdwg.mxu0
        %1157 = vmatpush.bf16.msra.mxu0 %v1030
        %1158 = vmatpush.bf16.msra.mxu0 %v1026
        %1159 = vmatpush.bf16.msra.mxu0 %v1022
        %1160 = vmatpush.bf16.msra.mxu0 %v1018
        %1161 = vmatpush.bf16.msra.mxu0 %v1014
        %1162 = vmatpush.bf16.msra.mxu0 %v1010
        %1163 = vmatpush.bf16.msra.mxu0 %v1006
        %1164 = vmatpush.bf16.msra.mxu0 %v1002
        %1165 = vmatmul.bf16.gmra.mxu0 %v735
        %v1166 = vpop.f32.mrf.mxu0
        %v1167 = vadd.f32 0.0, %v1166
        %v1168 = vpop.f32.mrf.mxu0
        %v1169 = vadd.f32 0.0, %v1168
        %1170 = vdwg.mxu0
        %1171 = vmatpush.bf16.msra.mxu0 %v1062
        %1172 = vmatpush.bf16.msra.mxu0 %v1058
        %1173 = vmatpush.bf16.msra.mxu0 %v1054
        %1174 = vmatpush.bf16.msra.mxu0 %v1050
        %1175 = vmatpush.bf16.msra.mxu0 %v1046
        %1176 = vmatpush.bf16.msra.mxu0 %v1042
        %1177 = vmatpush.bf16.msra.mxu0 %v1038
        %1178 = vmatpush.bf16.msra.mxu0 %v1034
        %1179 = vmatmul.bf16.gmra.mxu0 %v736
        %v1180 = vpop.f32.mrf.mxu0
        %v1181 = vadd.f32 %v1167, %v1180
        %v1182 = vpop.f32.mrf.mxu0
        %v1183 = vadd.f32 %v1169, %v1182
        %1184 = vdwg.mxu0
        %1185 = vmatpush.bf16.msra.mxu0 %v1031
        %1186 = vmatpush.bf16.msra.mxu0 %v1027
        %1187 = vmatpush.bf16.msra.mxu0 %v1023
        %1188 = vmatpush.bf16.msra.mxu0 %v1019
        %1189 = vmatpush.bf16.msra.mxu0 %v1015
        %1190 = vmatpush.bf16.msra.mxu0 %v1011
        %1191 = vmatpush.bf16.msra.mxu0 %v1007
        %1192 = vmatpush.bf16.msra.mxu0 %v1003
        %1193 = vmatmul.bf16.gmra.mxu0 %v735
        %v1194 = vpop.f32.mrf.mxu0
        %v1195 = vadd.f32 0.0, %v1194
        %v1196 = vpop.f32.mrf.mxu0
        %v1197 = vadd.f32 0.0, %v1196
        %1198 = vdwg.mxu0
        %1199 = vmatpush.bf16.msra.mxu0 %v1063
        %1200 = vmatpush.bf16.msra.mxu0 %v1059
        %1201 = vmatpush.bf16.msra.mxu0 %v1055
        %1202 = vmatpush.bf16.msra.mxu0 %v1051
        %1203 = vmatpush.bf16.msra.mxu0 %v1047
        %1204 = vmatpush.bf16.msra.mxu0 %v1043
        %1205 = vmatpush.bf16.msra.mxu0 %v1039
        %1206 = vmatpush.bf16.msra.mxu0 %v1035
        %1207 = vmatmul.bf16.gmra.mxu0 %v736
        %v1208 = vpop.f32.mrf.mxu0
        %v1209 = vadd.f32 %v1195, %v1208
        %v1210 = vpop.f32.mrf.mxu0
        %v1211 = vadd.f32 %v1197, %v1210
        %1212 = vdwg.mxu0
        %1213 = vmatpush.bf16.msra.mxu0 %v1032
        %1214 = vmatpush.bf16.msra.mxu0 %v1028
        %1215 = vmatpush.bf16.msra.mxu0 %v1024
        %1216 = vmatpush.bf16.msra.mxu0 %v1020
        %1217 = vmatpush.bf16.msra.mxu0 %v1016
        %1218 = vmatpush.bf16.msra.mxu0 %v1012
        %1219 = vmatpush.bf16.msra.mxu0 %v1008
        %1220 = vmatpush.bf16.msra.mxu0 %v1004
        %1221 = vmatmul.bf16.gmra.mxu0 %v735
        %v1222 = vpop.f32.mrf.mxu0
        %v1223 = vadd.f32 0.0, %v1222
        %v1224 = vpop.f32.mrf.mxu0
        %v1225 = vadd.f32 0.0, %v1224
        %1226 = vdwg.mxu0
        %1227 = vmatpush.bf16.msra.mxu0 %v1064
        %1228 = vmatpush.bf16.msra.mxu0 %v1060
        %1229 = vmatpush.bf16.msra.mxu0 %v1056
        %1230 = vmatpush.bf16.msra.mxu0 %v1052
        %1231 = vmatpush.bf16.msra.mxu0 %v1048
        %1232 = vmatpush.bf16.msra.mxu0 %v1044
        %1233 = vmatpush.bf16.msra.mxu0 %v1040
        %1234 = vmatpush.bf16.msra.mxu0 %v1036
        %1235 = vmatmul.bf16.gmra.mxu0 %v736
        %v1236 = vpop.f32.mrf.mxu0
        %v1237 = vadd.f32 %v1223, %v1236
        %v1238 = vpop.f32.mrf.mxu0
        %v1239 = vadd.f32 %v1225, %v1238
        %1240 = vdwg.mxu0
        %v1249 = vunpack.c.l.b16 %v737
        %v1250 = vunpack.c.h.b16 %v737
        %v1251 = vunpack.c.l.b16 %v738
        %v1252 = vunpack.c.h.b16 %v738
        %v1253 = vunpack.c.l.b16 %v739
        %v1254 = vunpack.c.h.b16 %v739
        %v1255 = vunpack.c.l.b16 %v740
        %v1256 = vunpack.c.h.b16 %v740
        %v1257 = vunpack.c.l.b16 %v741
        %v1258 = vunpack.c.h.b16 %v741
        %v1259 = vunpack.c.l.b16 %v742
        %v1260 = vunpack.c.h.b16 %v742
        %v1261 = vunpack.c.l.b16 %v743
        %v1262 = vunpack.c.h.b16 %v743
        %v1263 = vunpack.c.l.b16 %v744
        %v1264 = vunpack.c.h.b16 %v744
        %v1265 = vpack.c.b16 %v1253, %v1249
        %v1266 = vpack.c.b16 %v1254, %v1250
        %v1267 = vpack.c.b16 %v1255, %v1251
        %v1268 = vpack.c.b16 %v1256, %v1252
        %v1269 = vpack.c.b16 %v1261, %v1257
        %v1270 = vpack.c.b16 %v1262, %v1258
        %v1271 = vpack.c.b16 %v1263, %v1259
        %v1272 = vpack.c.b16 %v1264, %v1260
        %1281 = vmatpush.bf16.msra.mxu0 0
        %1282 = vmatpush.bf16.msra.mxu0 0
        %1283 = vmatpush.bf16.msra.mxu0 0
        %1284 = vmatpush.bf16.msra.mxu0 0
        %1285 = vmatpush.bf16.msra.mxu0 0
        %1286 = vmatpush.bf16.msra.mxu0 0
        %1287 = vmatpush.bf16.msra.mxu0 %v1269
        %1288 = vmatpush.bf16.msra.mxu0 %v1265
        %1289 = vmatmul.bf16.gmra.mxu0 %v658
        %v1290 = vpop.f32.mrf.mxu0
        %v1291 = vadd.f32 %v1153, %v1290
        %v1292 = vpop.f32.mrf.mxu0
        %v1293 = vadd.f32 %v1155, %v1292
        %1294 = vdwg.mxu0
        %1295 = vmatpush.bf16.msra.mxu0 0
        %1296 = vmatpush.bf16.msra.mxu0 0
        %1297 = vmatpush.bf16.msra.mxu0 0
        %1298 = vmatpush.bf16.msra.mxu0 0
        %1299 = vmatpush.bf16.msra.mxu0 0
        %1300 = vmatpush.bf16.msra.mxu0 0
        %1301 = vmatpush.bf16.msra.mxu0 %v1270
        %1302 = vmatpush.bf16.msra.mxu0 %v1266
        %1303 = vmatmul.bf16.gmra.mxu0 %v658
        %v1304 = vpop.f32.mrf.mxu0
        %v1305 = vadd.f32 %v1181, %v1304
        %v1306 = vpop.f32.mrf.mxu0
        %v1307 = vadd.f32 %v1183, %v1306
        %1308 = vdwg.mxu0
        %1309 = vmatpush.bf16.msra.mxu0 0
        %1310 = vmatpush.bf16.msra.mxu0 0
        %1311 = vmatpush.bf16.msra.mxu0 0
        %1312 = vmatpush.bf16.msra.mxu0 0
        %1313 = vmatpush.bf16.msra.mxu0 0
        %1314 = vmatpush.bf16.msra.mxu0 0
        %1315 = vmatpush.bf16.msra.mxu0 %v1271
        %1316 = vmatpush.bf16.msra.mxu0 %v1267
        %1317 = vmatmul.bf16.gmra.mxu0 %v658
        %v1318 = vpop.f32.mrf.mxu0
        %v1319 = vadd.f32 %v1209, %v1318
        %v1320 = vpop.f32.mrf.mxu0
        %v1321 = vadd.f32 %v1211, %v1320
        %1322 = vdwg.mxu0
        %1323 = vmatpush.bf16.msra.mxu0 0
        %1324 = vmatpush.bf16.msra.mxu0 0
        %1325 = vmatpush.bf16.msra.mxu0 0
        %1326 = vmatpush.bf16.msra.mxu0 0
        %1327 = vmatpush.bf16.msra.mxu0 0
        %1328 = vmatpush.bf16.msra.mxu0 0
        %1329 = vmatpush.bf16.msra.mxu0 %v1272
        %1330 = vmatpush.bf16.msra.mxu0 %v1268
        %1331 = vmatmul.bf16.gmra.mxu0 %v658
        %v1332 = vpop.f32.mrf.mxu0
        %v1333 = vadd.f32 %v1237, %v1332
        %v1334 = vpop.f32.mrf.mxu0
        %v1335 = vadd.f32 %v1239, %v1334
        %1336 = vdwg.mxu0
        %v1337 = vld [vmem:[%s10] sm:$0xf]
        %v1339 = vperm.slane %v1337, 0
        %v1340 = vperm.slane %v1337, 1
        %v1341 = vperm.slane %v1337, 2
        %v1342 = vperm.slane %v1337, 3
        %v1347 = vadd.f32 %v1291, %v1339
        %v1348 = vadd.f32 %v1305, %v1340
        %v1349 = vadd.f32 %v1319, %v1341
        %v1350 = vadd.f32 %v1333, %v1342
        %v1351 = vadd.f32 %v1293, %v1339
        %v1352 = vadd.f32 %v1307, %v1340
        %v1353 = vadd.f32 %v1321, %v1341
        %v1354 = vadd.f32 %v1335, %v1342
        %v1355 = vmax.f32 %v1347, 0.0
        %v1356 = vmax.f32 %v1348, 0.0
        %v1357 = vmax.f32 %v1349, 0.0
        %v1358 = vmax.f32 %v1350, 0.0
        %v1359 = vmax.f32 %v1351, 0.0
        %v1360 = vmax.f32 %v1352, 0.0
        %v1361 = vmax.f32 %v1353, 0.0
        %v1362 = vmax.f32 %v1354, 0.0
        %v1363 = vpack.c.bf16 %v1359, %v1355
        %v1364 = vpack.c.bf16 %v1360, %v1356
        %v1365 = vpack.c.bf16 %v1361, %v1357
        %v1366 = vpack.c.bf16 %v1362, %v1358
        %v1367 = vld [vmem:[#allocation8] sm:$0xf]
        %v1368 = vld [vmem:[#allocation8 + $0x4] sm:$0xf]
        %v1369 = vld [vmem:[#allocation8 + $0x8] sm:$0xf]
        %v1370 = vld [vmem:[#allocation8 + $0xc] sm:$0xf]
        %v1371 = vld [vmem:[#allocation8 + $0x10] sm:$0xf]
        %v1372 = vld [vmem:[#allocation8 + $0x14] sm:$0xf]
        %v1373 = vld [vmem:[#allocation8 + $0x18] sm:$0xf]
        %v1374 = vld [vmem:[#allocation8 + $0x1c] sm:$0xf]
        %v1375 = vld [vmem:[#allocation8 + $0x20] sm:$0xf]
        %v1376 = vld [vmem:[#allocation8 + $0x24] sm:$0xf]
        %v1377 = vld [vmem:[#allocation8 + $0x28] sm:$0xf]
        %v1378 = vld [vmem:[#allocation8 + $0x2c] sm:$0xf]
        %v1379 = vld [vmem:[#allocation8 + $0x30] sm:$0xf]
        %v1380 = vld [vmem:[#allocation8 + $0x34] sm:$0xf]
        %v1381 = vld [vmem:[#allocation8 + $0x38] sm:$0xf]
        %v1382 = vld [vmem:[#allocation8 + $0x3c] sm:$0xf]
        %v1383 = vld [vmem:[#allocation8 + $0x40] sm:$0xf]
        %v1384 = vld [vmem:[#allocation8 + $0x44] sm:$0xf]
        %v1385 = vld [vmem:[#allocation8 + $0x48] sm:$0xf]
        %v1386 = vld [vmem:[#allocation8 + $0x4c] sm:$0xf]
        %v1387 = vld [vmem:[#allocation8 + $0x50] sm:$0xf]
        %v1388 = vld [vmem:[#allocation8 + $0x54] sm:$0xf]
        %v1389 = vld [vmem:[#allocation8 + $0x58] sm:$0xf]
        %v1390 = vld [vmem:[#allocation8 + $0x5c] sm:$0xf]
        %v1391 = vld [vmem:[#allocation8 + $0x60] sm:$0xf]
        %v1392 = vld [vmem:[#allocation8 + $0x64] sm:$0xf]
        %v1393 = vld [vmem:[#allocation8 + $0x68] sm:$0xf]
        %v1394 = vld [vmem:[#allocation8 + $0x6c] sm:$0xf]
        %v1395 = vld [vmem:[#allocation8 + $0x70] sm:$0xf]
        %v1396 = vld [vmem:[#allocation8 + $0x74] sm:$0xf]
        %v1397 = vld [vmem:[#allocation8 + $0x78] sm:$0xf]
        %v1398 = vld [vmem:[#allocation8 + $0x7c] sm:$0xf]
        %v1399 = vld [vmem:[#allocation8 + $0x80] sm:$0xf]
        %v1400 = vld [vmem:[#allocation8 + $0x84] sm:$0xf]
        %v1401 = vld [vmem:[#allocation8 + $0x88] sm:$0xf]
        %v1402 = vld [vmem:[#allocation8 + $0x8c] sm:$0xf]
        %v1403 = vld [vmem:[#allocation8 + $0x90] sm:$0xf]
        %v1404 = vld [vmem:[#allocation8 + $0x94] sm:$0xf]
        %v1405 = vld [vmem:[#allocation8 + $0x98] sm:$0xf]
        %v1406 = vld [vmem:[#allocation8 + $0x9c] sm:$0xf]
        %v1407 = vld [vmem:[#allocation8 + $0xa0] sm:$0xf]
        %v1408 = vld [vmem:[#allocation8 + $0xa4] sm:$0xf]
        %v1409 = vld [vmem:[#allocation8 + $0xa8] sm:$0xf]
        %v1410 = vld [vmem:[#allocation8 + $0xac] sm:$0xf]
        %v1411 = vld [vmem:[#allocation8 + $0xb0] sm:$0xf]
        %v1412 = vld [vmem:[#allocation8 + $0xb4] sm:$0xf]
        %v1413 = vld [vmem:[#allocation8 + $0xb8] sm:$0xf]
        %v1414 = vld [vmem:[#allocation8 + $0xbc] sm:$0xf]
        %v1415 = vld [vmem:[#allocation8 + $0xc0] sm:$0xf]
        %v1416 = vld [vmem:[#allocation8 + $0xc4] sm:$0xf]
        %v1417 = vld [vmem:[#allocation8 + $0xc8] sm:$0xf]
        %v1418 = vld [vmem:[#allocation8 + $0xcc] sm:$0xf]
        %v1419 = vld [vmem:[#allocation8 + $0xd0] sm:$0xf]
        %v1420 = vld [vmem:[#allocation8 + $0xd4] sm:$0xf]
        %v1421 = vld [vmem:[#allocation8 + $0xd8] sm:$0xf]
        %v1422 = vld [vmem:[#allocation8 + $0xdc] sm:$0xf]
        %v1423 = vld [vmem:[#allocation8 + $0xe0] sm:$0xf]
        %v1424 = vld [vmem:[#allocation8 + $0xe4] sm:$0xf]
        %v1425 = vld [vmem:[#allocation8 + $0xe8] sm:$0xf]
        %v1426 = vld [vmem:[#allocation8 + $0xec] sm:$0xf]
        %v1427 = vld [vmem:[#allocation8 + $0xf0] sm:$0xf]
        %v1428 = vld [vmem:[#allocation8 + $0xf4] sm:$0xf]
        %v1429 = vld [vmem:[#allocation8 + $0xf8] sm:$0xf]
        %v1430 = vld [vmem:[#allocation8 + $0xfc] sm:$0xf]
        %v1431 = vld [vmem:[%s12] sm:$0x1]
        %v1433 = vperm.slane %v1431, 0
        %v1499 = vunpack.c.l.b16 %v1367
        %v1500 = vunpack.c.l.b16 %v1368
        %v1501 = vunpack.c.l.b16 %v1369
        %v1502 = vunpack.c.l.b16 %v1370
        %v1503 = vunpack.c.l.b16 %v1371
        %v1504 = vunpack.c.l.b16 %v1372
        %v1505 = vunpack.c.l.b16 %v1373
        %v1506 = vunpack.c.l.b16 %v1374
        %v1507 = vunpack.c.l.b16 %v1375
        %v1508 = vunpack.c.l.b16 %v1376
        %v1509 = vunpack.c.l.b16 %v1377
        %v1510 = vunpack.c.l.b16 %v1378
        %v1511 = vunpack.c.l.b16 %v1379
        %v1512 = vunpack.c.l.b16 %v1380
        %v1513 = vunpack.c.l.b16 %v1381
        %v1514 = vunpack.c.l.b16 %v1382
        %v1515 = vunpack.c.l.b16 %v1383
        %v1516 = vunpack.c.l.b16 %v1384
        %v1517 = vunpack.c.l.b16 %v1385
        %v1518 = vunpack.c.l.b16 %v1386
        %v1519 = vunpack.c.l.b16 %v1387
        %v1520 = vunpack.c.l.b16 %v1388
        %v1521 = vunpack.c.l.b16 %v1389
        %v1522 = vunpack.c.l.b16 %v1390
        %v1523 = vunpack.c.l.b16 %v1391
        %v1524 = vunpack.c.l.b16 %v1392
        %v1525 = vunpack.c.l.b16 %v1393
        %v1526 = vunpack.c.l.b16 %v1394
        %v1527 = vunpack.c.l.b16 %v1395
        %v1528 = vunpack.c.l.b16 %v1396
        %v1529 = vunpack.c.l.b16 %v1397
        %v1530 = vunpack.c.l.b16 %v1398
        %v1531 = vunpack.c.l.b16 %v1399
        %v1532 = vunpack.c.l.b16 %v1400
        %v1533 = vunpack.c.l.b16 %v1401
        %v1534 = vunpack.c.l.b16 %v1402
        %v1535 = vunpack.c.l.b16 %v1403
        %v1536 = vunpack.c.l.b16 %v1404
        %v1537 = vunpack.c.l.b16 %v1405
        %v1538 = vunpack.c.l.b16 %v1406
        %v1539 = vunpack.c.l.b16 %v1407
        %v1540 = vunpack.c.l.b16 %v1408
        %v1541 = vunpack.c.l.b16 %v1409
        %v1542 = vunpack.c.l.b16 %v1410
        %v1543 = vunpack.c.l.b16 %v1411
        %v1544 = vunpack.c.l.b16 %v1412
        %v1545 = vunpack.c.l.b16 %v1413
        %v1546 = vunpack.c.l.b16 %v1414
        %v1547 = vunpack.c.l.b16 %v1415
        %v1548 = vunpack.c.l.b16 %v1416
        %v1549 = vunpack.c.l.b16 %v1417
        %v1550 = vunpack.c.l.b16 %v1418
        %v1551 = vunpack.c.l.b16 %v1419
        %v1552 = vunpack.c.l.b16 %v1420
        %v1553 = vunpack.c.l.b16 %v1421
        %v1554 = vunpack.c.l.b16 %v1422
        %v1555 = vunpack.c.l.b16 %v1423
        %v1556 = vunpack.c.l.b16 %v1424
        %v1557 = vunpack.c.l.b16 %v1425
        %v1558 = vunpack.c.l.b16 %v1426
        %v1559 = vunpack.c.l.b16 %v1427
        %v1560 = vunpack.c.l.b16 %v1428
        %v1561 = vunpack.c.l.b16 %v1429
        %v1562 = vunpack.c.l.b16 %v1430
        %v1563 = vpack.c.b16 %v1500, %v1499
        %v1564 = vpack.c.b16 %v1502, %v1501
        %v1565 = vpack.c.b16 %v1504, %v1503
        %v1566 = vpack.c.b16 %v1506, %v1505
        %v1567 = vpack.c.b16 %v1508, %v1507
        %v1568 = vpack.c.b16 %v1510, %v1509
        %v1569 = vpack.c.b16 %v1512, %v1511
        %v1570 = vpack.c.b16 %v1514, %v1513
        %v1571 = vpack.c.b16 %v1516, %v1515
        %v1572 = vpack.c.b16 %v1518, %v1517
        %v1573 = vpack.c.b16 %v1520, %v1519
        %v1574 = vpack.c.b16 %v1522, %v1521
        %v1575 = vpack.c.b16 %v1524, %v1523
        %v1576 = vpack.c.b16 %v1526, %v1525
        %v1577 = vpack.c.b16 %v1528, %v1527
        %v1578 = vpack.c.b16 %v1530, %v1529
        %v1579 = vpack.c.b16 %v1532, %v1531
        %v1580 = vpack.c.b16 %v1534, %v1533
        %v1581 = vpack.c.b16 %v1536, %v1535
        %v1582 = vpack.c.b16 %v1538, %v1537
        %v1583 = vpack.c.b16 %v1540, %v1539
        %v1584 = vpack.c.b16 %v1542, %v1541
        %v1585 = vpack.c.b16 %v1544, %v1543
        %v1586 = vpack.c.b16 %v1546, %v1545
        %v1587 = vpack.c.b16 %v1548, %v1547
        %v1588 = vpack.c.b16 %v1550, %v1549
        %v1589 = vpack.c.b16 %v1552, %v1551
        %v1590 = vpack.c.b16 %v1554, %v1553
        %v1591 = vpack.c.b16 %v1556, %v1555
        %v1592 = vpack.c.b16 %v1558, %v1557
        %v1593 = vpack.c.b16 %v1560, %v1559
        %v1594 = vpack.c.b16 %v1562, %v1561
        %1627 = vmatpush.bf16.msra.mxu0 %v1570
        %1628 = vmatpush.bf16.msra.mxu0 %v1569
        %1629 = vmatpush.bf16.msra.mxu0 %v1568
        %1630 = vmatpush.bf16.msra.mxu0 %v1567
        %1631 = vmatpush.bf16.msra.mxu0 %v1566
        %1632 = vmatpush.bf16.msra.mxu0 %v1565
        %1633 = vmatpush.bf16.msra.mxu0 %v1564
        %1634 = vmatpush.bf16.msra.mxu0 %v1563
        %1635 = vmatmul.bf16.gmra.mxu0 %v1363
        %v1636 = vpop.f32.mrf.mxu0
        %v1637 = vadd.f32 %v1433, %v1636
        %v1638 = vpop.f32.mrf.mxu0
        %v1639 = vadd.f32 %v1433, %v1638
        %1640 = vdwg.mxu0
        %1641 = vmatpush.bf16.msra.mxu0 %v1578
        %1642 = vmatpush.bf16.msra.mxu0 %v1577
        %1643 = vmatpush.bf16.msra.mxu0 %v1576
        %1644 = vmatpush.bf16.msra.mxu0 %v1575
        %1645 = vmatpush.bf16.msra.mxu0 %v1574
        %1646 = vmatpush.bf16.msra.mxu0 %v1573
        %1647 = vmatpush.bf16.msra.mxu0 %v1572
        %1648 = vmatpush.bf16.msra.mxu0 %v1571
        %1649 = vmatmul.bf16.gmra.mxu0 %v1364
        %v1650 = vpop.f32.mrf.mxu0
        %v1651 = vadd.f32 %v1637, %v1650
        %v1652 = vpop.f32.mrf.mxu0
        %v1653 = vadd.f32 %v1639, %v1652
        %1654 = vdwg.mxu0
        %1655 = vmatpush.bf16.msra.mxu0 %v1586
        %1656 = vmatpush.bf16.msra.mxu0 %v1585
        %1657 = vmatpush.bf16.msra.mxu0 %v1584
        %1658 = vmatpush.bf16.msra.mxu0 %v1583
        %1659 = vmatpush.bf16.msra.mxu0 %v1582
        %1660 = vmatpush.bf16.msra.mxu0 %v1581
        %1661 = vmatpush.bf16.msra.mxu0 %v1580
        %1662 = vmatpush.bf16.msra.mxu0 %v1579
        %1663 = vmatmul.bf16.gmra.mxu0 %v1365
        %v1664 = vpop.f32.mrf.mxu0
        %v1665 = vadd.f32 %v1651, %v1664
        %v1666 = vpop.f32.mrf.mxu0
        %v1667 = vadd.f32 %v1653, %v1666
        %1668 = vdwg.mxu0
        %1669 = vmatpush.bf16.msra.mxu0 %v1594
        %1670 = vmatpush.bf16.msra.mxu0 %v1593
        %1671 = vmatpush.bf16.msra.mxu0 %v1592
        %1672 = vmatpush.bf16.msra.mxu0 %v1591
        %1673 = vmatpush.bf16.msra.mxu0 %v1590
        %1674 = vmatpush.bf16.msra.mxu0 %v1589
        %1675 = vmatpush.bf16.msra.mxu0 %v1588
        %1676 = vmatpush.bf16.msra.mxu0 %v1587
        %1677 = vmatmul.bf16.gmra.mxu0 %v1366
        %v1678 = vpop.f32.mrf.mxu0
        %v1679 = vadd.f32 %v1665, %v1678
        %v1680 = vpop.f32.mrf.mxu0
        %v1681 = vadd.f32 %v1667, %v1680
        %1682 = vdwg.mxu0
        %v1683 = vpack.c.bf16 %v1679, %v1679
        %v1684 = vpack.c.bf16 %v1681, %v1681
        %1685 = vst [vmem:[%s555] sm:$0xf] %v1683
        %1686 = vst [vmem:[%s555 + $0x4] sm:$0xf] %v1684
        %s1687 = sand.u32 %s328, 1
        %s1688 = scalar_lea.sflag [#allocation4], %s1687
        %s1689 = sand.u32 %s328, 1
        %s1690 = smul.addr %s1689, 8
        %s1691 = scalar_lea.vmem [#allocation10], %s1690
        %s1692 = sand.u32 %s354, 1
        %s1693 = scalar_lea.sflag [#allocation12], %s1692
        %s1694 = sand.u32 %s354, 1
        %s1695 = smul.addr %s1694, 8
        %s1696 = scalar_lea.vmem [#allocation11], %s1695
        // Predicated region
        $region89: #{tpu_custom_call.1} parent=71 // pred_check
          %p1697 = pneg %p338
        $region90: #{tpu_custom_call.1} parent=71 // pred_check_branch
          %1699 = sbr.rel (%p1697) target = $region92
        $region91: #{tpu_custom_call.1} parent=71 // pred_region
          %s1700 = smul.u32 2, %s37
          %1702 = vsyncadd %s1688, 0
          %s1703 = smul.addr %s1700, 4
          %s1704 = scalar_lea.hbm %s13, %s1703
          %s1705 = sshll.u32 %s1691, 4
          %s1706 = int_to_ptr.vmem [resolvable:$true] %s1705
          %s1707 = sshll.u32 %s1704, 4
          %s1708 = int_to_ptr.hbm [resolvable:$true] %s1707
          %1713 = dma.vmem_to_hbm [thread:$0]  %s1706, 128, %s1708, %s1688, 64, 64, 4
        $region92: #{tpu_custom_call.1} parent=71 // pred_fallthru
          _
        // Predicated region
        $region93: #{tpu_custom_call.1} parent=71 // pred_check
          %p1714 = pneg %p364
        $region94: #{tpu_custom_call.1} parent=71 // pred_check_branch
          %1716 = sbr.rel (%p1714) target = $region96
        $region95: #{tpu_custom_call.1} parent=71 // pred_region
          %s1717 = smul.u32 2, %s37
          %1719 = vsyncadd %s1693, 0
          %s1720 = smul.addr %s1717, 4
          %s1721 = scalar_lea.hbm %s14, %s1720
          %s1722 = sshll.u32 %s1696, 4
          %s1723 = int_to_ptr.vmem [resolvable:$true] %s1722
          %s1724 = sshll.u32 %s1721, 4
          %s1725 = int_to_ptr.hbm [resolvable:$true] %s1724
          %1730 = dma.vmem_to_hbm [thread:$0]  %s1723, 128, %s1725, %s1693, 64, 64, 4
        $region96: #{tpu_custom_call.1} parent=71 // pred_fallthru
          _
      $region72: #{tpu_custom_call.1} parent=5 // pred_fallthru
        _
      %p1731 = scmp.le.s32.totalorder 2, %s32
      // Predicated region
      $region97: #{tpu_custom_call.1} parent=5 // pred_check
        %p1732 = pneg %p1731
      $region98: #{tpu_custom_call.1} parent=5 // pred_check_branch
        %1734 = sbr.rel (%p1732) target = $region100
      $region99: #{tpu_custom_call.1} parent=5 // pred_region
        %s1735 = ssub.s32 %s32, 2
        // Predicated region
        $region101: #{tpu_custom_call.1} parent=99 // pred_check
          %p1736 = pneg %p344
        $region102: #{tpu_custom_call.1} parent=99 // pred_check_branch
          %1738 = sbr.rel (%p1736) target = $region104
        $region103: #{tpu_custom_call.1} parent=99 // pred_region
          %s1739 = sand.u32 %s329, 1
          %s1740 = scalar_lea.sflag [#allocation4], %s1739
          %s1741 = sand.u32 %s329, 1
          %s1742 = smul.addr %s1741, 8
          %s1743 = scalar_lea.vmem [#allocation10], %s1742
          %1745 = dma.done %s1740, 128
        $region104: #{tpu_custom_call.1} parent=99 // pred_fallthru
          _
        // Predicated region
        $region105: #{tpu_custom_call.1} parent=99 // pred_check
          %p1746 = pneg %p370
        $region106: #{tpu_custom_call.1} parent=99 // pred_check_branch
          %1748 = sbr.rel (%p1746) target = $region108
        $region107: #{tpu_custom_call.1} parent=99 // pred_region
          %s1749 = sand.u32 %s355, 1
          %s1750 = scalar_lea.sflag [#allocation12], %s1749
          %s1751 = sand.u32 %s355, 1
          %s1752 = smul.addr %s1751, 8
          %s1753 = scalar_lea.vmem [#allocation11], %s1752
          %1755 = dma.done %s1750, 128
        $region108: #{tpu_custom_call.1} parent=99 // pred_fallthru
          _
      $region100: #{tpu_custom_call.1} parent=5 // pred_fallthru
        _
    $region6: #{tpu_custom_call.1} parent=1 // loop_footer
      %s36 = sadd.s32 1, %s32
    $region7: #{tpu_custom_call.1} parent=1 // loop_footer_branch
      %31 = sbr.rel target = $region3
    $region8: #{tpu_custom_call.1} parent=1 // loop_exit
      _
    %1756 = vsyncpa [#allocation3], 1
    %s1757 = scalar_lea.sflag [#allocation3], 1
    %1758 = vsyncpa %s1757, 1
    %1759 = vsyncpa [#allocation6], 1
    %1760 = vsyncpa [#allocation9], 1
    %1761 = vsyncpa [#allocation4], 1
    %s1762 = scalar_lea.sflag [#allocation4], 1
    %1763 = vsyncpa %s1762, 1
    %1764 = vsyncpa [#allocation12], 1
    %s1765 = scalar_lea.sflag [#allocation12], 1
    %1766 = vsyncpa %s1765, 1

</llo_original>
